<compile_context>
chip_gen: v6e
topology: v6e:2x2x1
jax: 0.10.0
libtpu: 0.0.40
codegen_flags: <defaults>
</compile_context>

<pallas_src>
import functools
import math

import jax
import jax.numpy as jnp
from jax.experimental import pallas as pl
from jax.experimental.pallas import tpu as pltpu


# ----------------------------------------------------------------------------
# Generation-aware compiler params / tiling helpers
# ----------------------------------------------------------------------------
@functools.lru_cache(maxsize=None)
def _vmem_capacity_bytes():
    try:
        return int(getattr(pltpu.get_tpu_info(), "vmem_capacity_bytes",
                           64 * 1024 * 1024))
    except Exception:
        return 64 * 1024 * 1024


def _vmem_limit_bytes():
    # Leave headroom for compiler-internal scratch; 100 MiB cap on 128-MiB
    # parts (v5e/v6e), ~48 MiB on v7x (64 MiB physical per TensorCore).
    cap = _vmem_capacity_bytes()
    return int(max(32 * 1024 * 1024,
                   min(cap - 16 * 1024 * 1024, 100 * 1024 * 1024)))


def _compiler_params(dimension_semantics):
    return pltpu.CompilerParams(
        dimension_semantics=dimension_semantics,
        vmem_limit_bytes=_vmem_limit_bytes(),
    )


def _pick_tile(total, candidates):
    for c in candidates:
        if c <= total and total % c == 0:
            return c
    return total


# ----------------------------------------------------------------------------
# Kernel 1: fused layer-1 bidirectional RNN.
# Grid = (direction,).  Per direction: (a) start the W_hh HBM->VMEM DMA,
# (b) hoisted input projection loop writes the whole (T,B,H) pre slab into a
# VMEM scratch (hides the DMA), (c) step 0 = relu(pre_0) (no W_hh needed),
# (d) wait for W_hh, (e) serial recurrence loop with only the (B,H)x(H,H)
# MXU call per step.  Backward direction simply walks time in reverse, so the
# output is already in PyTorch's output ordering.
# ----------------------------------------------------------------------------
def _layer1_kernel(x_ref, wih_ref, b_ref, whh_hbm, y_ref,
                   pre_scr, h_scr, whh_vmem, sem):
    d = pl.program_id(0)
    T, _, _ = pre_scr.shape

    # Stage W_hh[d]; first needed only at recurrence step t=1.
    cp = pltpu.make_async_copy(whh_hbm.at[d], whh_vmem, sem.at[0])
    cp.start()

    # Hoisted input projection: pre[t] = x_t @ W_ih^T + (b_ih + b_hh).
    @pl.loop(0, T)
    def _(t):
        pre_scr[t] = (jnp.dot(x_ref[t], wih_ref[0],
                              preferred_element_type=jnp.float32)
                      + b_ref[0])

    # Step 0 of the recurrence: h_prev == 0, so no W_hh matmul is needed.
    t0 = d * (T - 1)                 # forward starts at t=0, backward at T-1
    h0 = jnp.maximum(pre_scr[t0], 0.0)
    h_scr[...] = h0.astype(h_scr.dtype)
    y_ref[t0] = h0.astype(y_ref.dtype)

    cp.wait()                        # W_hh resident from step 1 onwards

    sign = 1 - 2 * d                 # +1 forward, -1 backward

    @pl.loop(1, T)
    def _(t):
        t_eff = t0 + sign * t
        acc = pre_scr[t_eff] + jnp.dot(h_scr[...], whh_vmem[...],
                                       preferred_element_type=jnp.float32)
        hb = jnp.maximum(acc, 0.0).astype(h_scr.dtype)
        h_scr[...] = hb
        y_ref[t_eff] = hb


def layer1_birnn(x_tm, w_ih, bias, w_hh):
    """x_tm: (T,B,D) bf16; w_ih: (2,D,H) bf16; bias: (2,1,H) f32;
    w_hh: (2,H,H) bf16  ->  y1: (2,T,B,H) bf16 (PyTorch output ordering)."""
    T, B, D = x_tm.shape
    H = w_ih.shape[-1]
    return pl.pallas_call(
        _layer1_kernel,
        out_shape=jax.ShapeDtypeStruct((2, T, B, H), jnp.bfloat16),
        grid_spec=pltpu.PrefetchScalarGridSpec(
            num_scalar_prefetch=0,
            grid=(2,),                                        # direction
            in_specs=[
                pl.BlockSpec((T, B, D), lambda d: (0, 0, 0)),
                pl.BlockSpec((1, D, H), lambda d: (d, 0, 0)),
                pl.BlockSpec((1, 1, H), lambda d: (d, 0, 0)),
                pl.BlockSpec(memory_space=pl.ANY),            # W_hh stays in HBM
            ],
            out_specs=pl.BlockSpec((None, T, B, H), lambda d: (d, 0, 0, 0)),
            scratch_shapes=[
                pltpu.VMEM((T, B, H), jnp.float32),           # hoisted pre slab
                pltpu.VMEM((B, H), jnp.bfloat16),             # hidden carry
                pltpu.VMEM((H, H), w_hh.dtype),               # resident W_hh
                pltpu.SemaphoreType.DMA((1,)),
            ],
        ),
        compiler_params=_compiler_params(("parallel",)),
    )(x_tm, w_ih, bias, w_hh)


# ----------------------------------------------------------------------------
# Kernel 2: layer-2 input projections (concat-free via split weights).
#   pre2_f[t] = y1_fwd[t] @ Wa + y1_bwd[t] @ Wb + b          (bf16 to HBM)
#   bwd2      = relu(y1[:, T-1] concat-proj with backward-dir weights)
# 2-D tiled: columns (j) outer so each (2,H,tH) weight tile is DMA'd once,
# activation row tiles (m) stream underneath.
# ----------------------------------------------------------------------------
def _l2_proj_kernel(yflat_ref, wf_ref, bf_ref, ylast_ref, wb_ref, bb_ref,
                    pre_ref, bwd_ref):
    m = pl.program_id(1)
    pre = (jnp.dot(yflat_ref[0], wf_ref[0], preferred_element_type=jnp.float32)
           + jnp.dot(yflat_ref[1], wf_ref[1], preferred_element_type=jnp.float32)
           + bf_ref[...])
    pre_ref[...] = pre.astype(pre_ref.dtype)

    @pl.when(m == 0)
    def _():
        bwd = (jnp.dot(ylast_ref[0, 0], wb_ref[0],
                       preferred_element_type=jnp.float32)
               + jnp.dot(ylast_ref[1, 0], wb_ref[1],
                         preferred_element_type=jnp.float32)
               + bb_ref[...])
        bwd_ref[...] = jnp.maximum(bwd, 0.0).astype(bwd_ref.dtype)


def layer2_input_projection(y1, y1_flat, w_ih_f, b_f, w_ih_b, b_b):
    _, T, B, H = y1.shape
    TB = T * B
    big_vmem = _vmem_capacity_bytes() >= 96 * 1024 * 1024
    tH = _pick_tile(H, (1024,) if big_vmem else (512,))
    tM = _pick_tile(TB, (512, 256) if big_vmem else (256,))
    nH, nM = H // tH, TB // tM
    return pl.pallas_call(
        _l2_proj_kernel,
        out_shape=(jax.ShapeDtypeStruct((TB, H), jnp.bfloat16),  # pre2_fwd
                   jax.ShapeDtypeStruct((B, H), jnp.bfloat16)),  # bwd last-step
        grid_spec=pltpu.PrefetchScalarGridSpec(
            num_scalar_prefetch=0,
            grid=(nH, nM),                               # columns outer, rows inner
            in_specs=[
                pl.BlockSpec((2, tM, H), lambda j, m: (0, m, 0)),
                pl.BlockSpec((2, H, tH), lambda j, m: (0, 0, j)),
                pl.BlockSpec((1, tH), lambda j, m: (0, j)),
                pl.BlockSpec((2, 1, B, H), lambda j, m: (0, T - 1, 0, 0)),
                pl.BlockSpec((2, H, tH), lambda j, m: (0, 0, j)),
                pl.BlockSpec((1, tH), lambda j, m: (0, j)),
            ],
            out_specs=[pl.BlockSpec((tM, tH), lambda j, m: (m, j)),
                       pl.BlockSpec((B, tH), lambda j, m: (0, j))],
        ),
        compiler_params=_compiler_params(("parallel", "arbitrary")),
    )(y1_flat, w_ih_f, b_f, y1, w_ih_b, b_b)


# ----------------------------------------------------------------------------
# Kernel 3: layer-2 forward recurrence (time loop inside, final hidden only)
# with the mean/std FC heads fused as an epilogue.  W_hh is staged from HBM
# at kernel start; step 0 needs no W_hh, so the wait is deferred to step 1.
# ----------------------------------------------------------------------------
def _l2_rec_heads_kernel(pre_ref, whh_hbm, bwd_ref, wh_ref, bh_ref,
                         mean_ref, std_ref, h_scr, whh_vmem, sem, *, min_std):
    T = pre_ref.shape[0]
    P = mean_ref.shape[-1]

    cp = pltpu.make_async_copy(whh_hbm, whh_vmem, sem.at[0])
    cp.start()

    # Step 0: h_prev == 0 -> no W_hh matmul; the DMA keeps flowing meanwhile.
    h_scr[...] = jnp.maximum(pre_ref[0].astype(jnp.float32),
                             0.0).astype(h_scr.dtype)

    cp.wait()

    @pl.loop(1, T)
    def _(t):
        acc = pre_ref[t].astype(jnp.float32) + jnp.dot(
            h_scr[...], whh_vmem[...], preferred_element_type=jnp.float32)
        h_scr[...] = jnp.maximum(acc, 0.0).astype(h_scr.dtype)

    # Fused heads on x_last = [h2_fwd(T-1)  ||  h2_bwd first step], with the
    # mean/variance weights merged into one (2, H, 2P) operand (concat-free).
    out = (jnp.dot(h_scr[...], wh_ref[0], preferred_element_type=jnp.float32)
           + jnp.dot(bwd_ref[...], wh_ref[1], preferred_element_type=jnp.float32)
           + bh_ref[...])
    mean_ref[...] = out[:, :P]
    std_ref[...] = jax.nn.softplus(out[:, P:]) + jnp.float32(min_std)


def layer2_recurrence_and_heads(pre_fwd, w_hh, bwd, head_w, head_b, *, min_std):
    T, B, H = pre_fwd.shape
    P2 = head_w.shape[-1]
    P = P2 // 2
    kernel = functools.partial(_l2_rec_heads_kernel, min_std=min_std)
    return pl.pallas_call(
        kernel,
        out_shape=(jax.ShapeDtypeStruct((B, P), jnp.float32),
                   jax.ShapeDtypeStruct((B, P), jnp.float32)),
        grid_spec=pltpu.PrefetchScalarGridSpec(
            num_scalar_prefetch=0,
            grid=(1,),
            in_specs=[
                pl.BlockSpec((T, B, H), lambda i: (0, 0, 0)),
                pl.BlockSpec(memory_space=pl.ANY),            # W_hh stays in HBM
                pl.BlockSpec((B, H), lambda i: (0, 0)),
                pl.BlockSpec((2, H, P2), lambda i: (0, 0, 0)),
                pl.BlockSpec((1, P2), lambda i: (0, 0)),
            ],
            out_specs=[pl.BlockSpec((B, P), lambda i: (0, 0)),
                       pl.BlockSpec((B, P), lambda i: (0, 0))],
            scratch_shapes=[
                pltpu.VMEM((B, H), jnp.bfloat16),             # hidden carry
                pltpu.VMEM((H, H), w_hh.dtype),               # resident W_hh
                pltpu.SemaphoreType.DMA((1,)),
            ],
        ),
        compiler_params=_compiler_params(("arbitrary",)),
    )(pre_fwd, w_hh, bwd, head_w, head_b)


# ----------------------------------------------------------------------------
# Full forward pass
# ----------------------------------------------------------------------------
def plan_recognition_forward(params, perceptual_emb, *, min_std):
    B, T, D = perceptual_emb.shape
    l1, l2 = params["layer1"], params["layer2"]
    H = l1["w_hh"].shape[-1]

    # Single batch-first -> time-major transpose of the raw input; all other
    # inter-kernel reshapes are free contiguous metadata changes.
    x_tm = jnp.transpose(perceptual_emb.astype(jnp.bfloat16), (1, 0, 2))

    # Layer 1: fused projection + bidirectional recurrence (one pallas_call).
    y1 = layer1_birnn(x_tm, l1["w_ih"], l1["b"], l1["w_hh"])   # (2,T,B,H) bf16

    # Layer 2: batched forward projection + single-step backward output.
    y1_flat = y1.reshape(2, T * B, H)
    pre2_f, bwd2 = layer2_input_projection(y1, y1_flat, l2["w_ih_f"], l2["b_f"],
                                           l2["w_ih_b"], l2["b_b"])

    # Layer 2 forward recurrence (final hidden only) + fused FC heads.
    mean, std = layer2_recurrence_and_heads(
        pre2_f.reshape(T, B, H), l2["w_hh_f"], bwd2,
        params["head_w"], params["head_b"], min_std=min_std)
    return mean, std


# ----------------------------------------------------------------------------
# Deterministic synthetic parameter init (PyTorch-style uniform ranges).
# Weights stored pre-transposed (in, out), biases pre-summed (b_ih + b_hh),
# layer-2 / head weights stored split into (fwd, bwd) halves (concat-free);
# mean/variance head weights merged along the output columns.
# ----------------------------------------------------------------------------
def init_params(key, in_features, hidden, plan_features, *, dtype=jnp.bfloat16):
    k_rnn = 1.0 / math.sqrt(hidden)
    k_fc = 1.0 / math.sqrt(2 * hidden)         # FC fan-in = 2*hidden (bi concat)

    def u(k, shape, bound, dt):
        return jax.random.uniform(k, shape, jnp.float32, -bound, bound).astype(dt)

    keys = iter(jax.random.split(key, 32))
    H, D, P = hidden, in_features, plan_features

    params = {
        "layer1": {
            "w_ih": u(next(keys), (2, D, H), k_rnn, dtype),
            "w_hh": u(next(keys), (2, H, H), k_rnn, dtype),
            "b": (u(next(keys), (2, 1, H), k_rnn, jnp.float32)
                  + u(next(keys), (2, 1, H), k_rnn, jnp.float32)),
        },
        "layer2": {
            # halves of W_ih^T: index 0 multiplies y1_fwd, index 1 y1_bwd
            "w_ih_f": u(next(keys), (2, H, H), k_rnn, dtype),
            "b_f": (u(next(keys), (1, H), k_rnn, jnp.float32)
                    + u(next(keys), (1, H), k_rnn, jnp.float32)),
            "w_hh_f": u(next(keys), (H, H), k_rnn, dtype),
            "w_ih_b": u(next(keys), (2, H, H), k_rnn, dtype),
            "b_b": (u(next(keys), (1, H), k_rnn, jnp.float32)
                    + u(next(keys), (1, H), k_rnn, jnp.float32)),
            # NOTE: layer-2 backward W_hh is mathematically unused by forward()
            # (only rnn_out[:, -1] is consumed; that slot is the backward
            # pass's first step with h_prev == 0), so it is not created.
        },
        # columns [0:P] -> mean_fc, [P:2P] -> variance_fc; rows: index 0
        # multiplies the layer-2 forward hidden, index 1 the backward hidden.
        "head_w": jnp.concatenate(
            [u(next(keys), (2, H, P), k_fc, dtype),
             u(next(keys), (2, H, P), k_fc, dtype)], axis=-1),
        "head_b": jnp.concatenate(
            [u(next(keys), (1, P), k_fc, jnp.float32),
             u(next(keys), (1, P), k_fc, jnp.float32)], axis=-1),
    }
    return params


if __name__ == "__main__":
    # Small shapes (the real module uses hidden=2048; scaled down here).
    B, T = 2, 8
    in_features = 16
    hidden = 32
    plan_features = 8
    min_std = 1e-3

    key = jax.random.PRNGKey(0)
    k_params, k_input = jax.random.split(key)
    params = init_params(k_params, in_features, hidden, plan_features)
    perceptual_emb = jax.random.normal(k_input, (B, T, in_features), jnp.float32)

    fwd = jax.jit(functools.partial(plan_recognition_forward, min_std=min_std))
    mean, std = fwd(params, perceptual_emb)
    jax.block_until_ready((mean, std))

    assert mean.shape == (B, plan_features) and std.shape == (B, plan_features)
    assert bool(jnp.all(jnp.isfinite(mean))) and bool(jnp.all(jnp.isfinite(std)))
    assert bool(jnp.all(std > 0.0))
    print("KERNEL_OK")
</pallas_src>

<mosaic_0001>
module attributes {stable_mosaic.version = 11 : i64} {
  func.func @_layer1_kernel(%arg0: i32, %arg1: memref<8x2x16xbf16, #tpu.memory_space<vmem>>, %arg2: memref<1x16x32xbf16, #tpu.memory_space<vmem>>, %arg3: memref<1x1x32xf32, #tpu.memory_space<vmem>>, %arg4: memref<2x32x32xbf16, #tpu.memory_space<any>>, %arg5: memref<1x8x2x32xbf16, #tpu.memory_space<vmem>>, %arg6: memref<8x2x32xf32, #tpu.memory_space<vmem>>, %arg7: memref<2x32xbf16, #tpu.memory_space<vmem>>, %arg8: memref<32x32xbf16, #tpu.memory_space<vmem>>, %arg9: memref<1x!tpu.dma_semaphore, #tpu.memory_space<semaphore_mem>>) attributes {dimension_semantics = [#tpu.dimension_semantics<parallel>], iteration_bounds = array<i64: 2>, scalar_prefetch = 0 : i64, scratch_operands = 4 : i64, tpu.core_type = #tpu.core_type<tc>, window_params = [{pipeline_mode = #tpu.pipeline_mode<synchronous>, transform_indices = @transform_0, window_bounds = array<i64: 8, 2, 16>}, {transform_indices = @transform_1, window_bounds = array<i64: 1, 16, 32>}, {transform_indices = @transform_2, window_bounds = array<i64: 1, 1, 32>}, {}, {transform_indices = @transform_4, window_bounds = array<i64: 1, 8, 2, 32>}]} {
    %c0_i32 = arith.constant 0 : i32
    %c0_i32_0 = arith.constant 0 : i32
    %c0_i32_1 = arith.constant 0 : i32
    %0 = tpu.memref_slice %arg4[%arg0, %c0_i32_0, %c0_i32_1] : memref<2x32x32xbf16, #tpu.memory_space<any>> -> memref<1x32x32xbf16, #tpu.memory_space<any>>
    %1 = tpu.memref_squeeze %0 : memref<1x32x32xbf16, #tpu.memory_space<any>> -> memref<32x32xbf16, #tpu.memory_space<any>>
    %2 = tpu.memref_slice %arg9[%c0_i32] : memref<1x!tpu.dma_semaphore, #tpu.memory_space<semaphore_mem>> -> memref<1x!tpu.dma_semaphore, #tpu.memory_space<semaphore_mem>>
    %3 = tpu.memref_squeeze %2 : memref<1x!tpu.dma_semaphore, #tpu.memory_space<semaphore_mem>> -> memref<!tpu.dma_semaphore, #tpu.memory_space<semaphore_mem>>
    tpu.enqueue_dma source(%1 : memref<32x32xbf16, #tpu.memory_space<any>>) target(%arg8 : memref<32x32xbf16, #tpu.memory_space<vmem>>) target_semaphore(%3 : memref<!tpu.dma_semaphore, #tpu.memory_space<semaphore_mem>>)
    %c0_i32_2 = arith.constant 0 : i32
    %c8_i32 = arith.constant 8 : i32
    %4 = arith.addi %c0_i32_2, %c8_i32 : i32
    %c1_i32 = arith.constant 1 : i32
    scf.for %arg10 = %c0_i32_2 to %4 step %c1_i32  : i32 {
      %c1_i32_18 = arith.constant 1 : i32
      %25 = arith.muli %arg10, %c1_i32_18 : i32
      %c0_i32_19 = arith.constant 0 : i32
      %26 = arith.addi %c0_i32_19, %25 : i32
      %27 = arith.index_cast %26 : i32 to index
      %c0_20 = arith.constant 0 : index
      %c0_21 = arith.constant 0 : index
      %28 = vector.load %arg1[%27, %c0_20, %c0_21] : memref<8x2x16xbf16, #tpu.memory_space<vmem>>, vector<1x2x16xbf16>
      %29 = vector.shape_cast %28 : vector<1x2x16xbf16> to vector<2x16xbf16>
      %c0_22 = arith.constant 0 : index
      %c0_23 = arith.constant 0 : index
      %c0_24 = arith.constant 0 : index
      %30 = vector.load %arg2[%c0_22, %c0_23, %c0_24] : memref<1x16x32xbf16, #tpu.memory_space<vmem>>, vector<1x16x32xbf16>
      %31 = vector.shape_cast %30 : vector<1x16x32xbf16> to vector<16x32xbf16>
      %cst_25 = arith.constant dense<0.000000e+00> : vector<2x32xf32>
      %32 = tpu.matmul %29, %31, %cst_25 {dimension_numbers = #tpu.dot_dimension_numbers<[1], [0], [0], [1], [0, 0, 1, 1], [], []>} : vector<2x16xbf16>, vector<16x32xbf16>, vector<2x32xf32> -> vector<2x32xf32>
      %c0_26 = arith.constant 0 : index
      %c0_27 = arith.constant 0 : index
      %c0_28 = arith.constant 0 : index
      %33 = vector.load %arg3[%c0_26, %c0_27, %c0_28] : memref<1x1x32xf32, #tpu.memory_space<vmem>>, vector<1x1x32xf32>
      %34 = vector.shape_cast %33 : vector<1x1x32xf32> to vector<1x32xf32>
      %35 = vector.broadcast %34 : vector<1x32xf32> to vector<2x32xf32>
      %36 = arith.addf %32, %35 : vector<2x32xf32>
      %37 = arith.index_cast %26 : i32 to index
      %c0_29 = arith.constant 0 : index
      %c0_30 = arith.constant 0 : index
      %38 = vector.load %arg6[%37, %c0_29, %c0_30] : memref<8x2x32xf32, #tpu.memory_space<vmem>>, vector<1x2x32xf32>
      %39 = vector.shape_cast %38 : vector<1x2x32xf32> to vector<2x32xf32>
      %40 = vector.shape_cast %36 : vector<2x32xf32> to vector<1x2x32xf32>
      tpu.vector_store %arg6[%37, %c0_29, %c0_30], %40 {strides = array<i32>} : memref<8x2x32xf32, #tpu.memory_space<vmem>>, vector<1x2x32xf32>,
    }
    %c8_i32_3 = arith.constant 8 : i32
    %c7_i32 = arith.constant 7 : i32
    %5 = arith.muli %arg0, %c7_i32 : i32
    %6 = arith.index_cast %5 : i32 to index
    %c0 = arith.constant 0 : index
    %c0_4 = arith.constant 0 : index
    %7 = vector.load %arg6[%6, %c0, %c0_4] : memref<8x2x32xf32, #tpu.memory_space<vmem>>, vector<1x2x32xf32>
    %8 = vector.shape_cast %7 : vector<1x2x32xf32> to vector<2x32xf32>
    %cst = arith.constant 0.000000e+00 : f32
    %9 = vector.broadcast %cst : f32 to vector<2x32xf32>
    %10 = arith.maximumf %8, %9 : vector<2x32xf32>
    %11 = arith.truncf %10 : vector<2x32xf32> to vector<2x32xbf16>
    %c0_5 = arith.constant 0 : index
    %c0_6 = arith.constant 0 : index
    %12 = vector.load %arg7[%c0_5, %c0_6] : memref<2x32xbf16, #tpu.memory_space<vmem>>, vector<2x32xbf16>
    tpu.vector_store %arg7[%c0_5, %c0_6], %11 {strides = array<i32>} : memref<2x32xbf16, #tpu.memory_space<vmem>>, vector<2x32xbf16>,
    %13 = arith.truncf %10 : vector<2x32xf32> to vector<2x32xbf16>
    %c0_7 = arith.constant 0 : index
    %14 = arith.index_cast %5 : i32 to index
    %c0_8 = arith.constant 0 : index
    %c0_9 = arith.constant 0 : index
    %15 = vector.load %arg5[%c0_7, %14, %c0_8, %c0_9] : memref<1x8x2x32xbf16, #tpu.memory_space<vmem>>, vector<1x1x2x32xbf16>
    %16 = vector.shape_cast %15 : vector<1x1x2x32xbf16> to vector<2x32xbf16>
    %17 = vector.shape_cast %13 : vector<2x32xbf16> to vector<1x1x2x32xbf16>
    tpu.vector_store %arg5[%c0_7, %14, %c0_8, %c0_9], %17 {strides = array<i32>} : memref<1x8x2x32xbf16, #tpu.memory_space<vmem>>, vector<1x1x2x32xbf16>,
    %c0_i32_10 = arith.constant 0 : i32
    %c0_i32_11 = arith.constant 0 : i32
    %c0_i32_12 = arith.constant 0 : i32
    %18 = tpu.memref_slice %arg4[%arg0, %c0_i32_11, %c0_i32_12] : memref<2x32x32xbf16, #tpu.memory_space<any>> -> memref<1x32x32xbf16, #tpu.memory_space<any>>
    %19 = tpu.memref_squeeze %18 : memref<1x32x32xbf16, #tpu.memory_space<any>> -> memref<32x32xbf16, #tpu.memory_space<any>>
    %20 = tpu.memref_slice %arg9[%c0_i32_10] : memref<1x!tpu.dma_semaphore, #tpu.memory_space<semaphore_mem>> -> memref<1x!tpu.dma_semaphore, #tpu.memory_space<semaphore_mem>>
    %21 = tpu.memref_squeeze %20 : memref<1x!tpu.dma_semaphore, #tpu.memory_space<semaphore_mem>> -> memref<!tpu.dma_semaphore, #tpu.memory_space<semaphore_mem>>
    tpu.wait_dma2 semaphore(%21 : memref<!tpu.dma_semaphore, #tpu.memory_space<semaphore_mem>>) src(%19 : memref<32x32xbf16, #tpu.memory_space<any>>) dst(%arg8 : memref<32x32xbf16, #tpu.memory_space<vmem>>)
    %c2_i32 = arith.constant 2 : i32
    %22 = arith.muli %c2_i32, %arg0 : i32
    %c1_i32_13 = arith.constant 1 : i32
    %23 = arith.subi %c1_i32_13, %22 : i32
    %c0_i32_14 = arith.constant 0 : i32
    %c7_i32_15 = arith.constant 7 : i32
    %24 = arith.addi %c0_i32_14, %c7_i32_15 : i32
    %c1_i32_16 = arith.constant 1 : i32
    scf.for %arg10 = %c0_i32_14 to %24 step %c1_i32_16  : i32 {
      %c1_i32_18 = arith.constant 1 : i32
      %25 = arith.muli %arg10, %c1_i32_18 : i32
      %c1_i32_19 = arith.constant 1 : i32
      %26 = arith.addi %c1_i32_19, %25 : i32
      %27 = arith.muli %23, %26 : i32
      %28 = arith.addi %5, %27 : i32
      %29 = arith.index_cast %28 : i32 to index
      %c0_20 = arith.constant 0 : index
      %c0_21 = arith.constant 0 : index
      %30 = vector.load %arg6[%29, %c0_20, %c0_21] : memref<8x2x32xf32, #tpu.memory_space<vmem>>, vector<1x2x32xf32>
      %31 = vector.shape_cast %30 : vector<1x2x32xf32> to vector<2x32xf32>
      %c0_22 = arith.constant 0 : index
      %c0_23 = arith.constant 0 : index
      %32 = vector.load %arg7[%c0_22, %c0_23] : memref<2x32xbf16, #tpu.memory_space<vmem>>, vector<2x32xbf16>
      %c0_24 = arith.constant 0 : index
      %c0_25 = arith.constant 0 : index
      %33 = vector.load %arg8[%c0_24, %c0_25] : memref<32x32xbf16, #tpu.memory_space<vmem>>, vector<32x32xbf16>
      %cst_26 = arith.constant dense<0.000000e+00> : vector<2x32xf32>
      %34 = tpu.matmul %32, %33, %cst_26 {dimension_numbers = #tpu.dot_dimension_numbers<[1], [0], [0], [1], [0, 0, 1, 1], [], []>} : vector<2x32xbf16>, vector<32x32xbf16>, vector<2x32xf32> -> vector<2x32xf32>
      %35 = arith.addf %31, %34 : vector<2x32xf32>
      %cst_27 = arith.constant 0.000000e+00 : f32
      %36 = vector.broadcast %cst_27 : f32 to vector<2x32xf32>
      %37 = arith.maximumf %35, %36 : vector<2x32xf32>
      %38 = arith.truncf %37 : vector<2x32xf32> to vector<2x32xbf16>
      %c0_28 = arith.constant 0 : index
      %c0_29 = arith.constant 0 : index
      %39 = vector.load %arg7[%c0_28, %c0_29] : memref<2x32xbf16, #tpu.memory_space<vmem>>, vector<2x32xbf16>
      tpu.vector_store %arg7[%c0_28, %c0_29], %38 {strides = array<i32>} : memref<2x32xbf16, #tpu.memory_space<vmem>>, vector<2x32xbf16>,
      %c0_30 = arith.constant 0 : index
      %40 = arith.index_cast %28 : i32 to index
      %c0_31 = arith.constant 0 : index
      %c0_32 = arith.constant 0 : index
      %41 = vector.load %arg5[%c0_30, %40, %c0_31, %c0_32] : memref<1x8x2x32xbf16, #tpu.memory_space<vmem>>, vector<1x1x2x32xbf16>
      %42 = vector.shape_cast %41 : vector<1x1x2x32xbf16> to vector<2x32xbf16>
      %43 = vector.shape_cast %38 : vector<2x32xbf16> to vector<1x1x2x32xbf16>
      tpu.vector_store %arg5[%c0_30, %40, %c0_31, %c0_32], %43 {strides = array<i32>} : memref<1x8x2x32xbf16, #tpu.memory_space<vmem>>, vector<1x1x2x32xbf16>,
    }
    %c7_i32_17 = arith.constant 7 : i32
    return
  }
  func.func @transform_0(%arg0: i32) -> (i32, i32, i32) {
    %c0_i32 = arith.constant 0 : i32
    %c0_i32_0 = arith.constant 0 : i32
    %c0_i32_1 = arith.constant 0 : i32
    %c0_i32_2 = arith.constant 0 : i32
    return %c0_i32, %c0_i32_0, %c0_i32_1 : i32, i32, i32
  }
  func.func @transform_1(%arg0: i32) -> (i32, i32, i32) {
    %c0_i32 = arith.constant 0 : i32
    %c0_i32_0 = arith.constant 0 : i32
    %c0_i32_1 = arith.constant 0 : i32
    return %arg0, %c0_i32, %c0_i32_0 : i32, i32, i32
  }
  func.func @transform_2(%arg0: i32) -> (i32, i32, i32) {
    %c0_i32 = arith.constant 0 : i32
    %c0_i32_0 = arith.constant 0 : i32
    %c0_i32_1 = arith.constant 0 : i32
    return %arg0, %c0_i32, %c0_i32_0 : i32, i32, i32
  }
  func.func @transform_4(%arg0: i32) -> (i32, i32, i32, i32) {
    %c0_i32 = arith.constant 0 : i32
    %c0_i32_0 = arith.constant 0 : i32
    %c0_i32_1 = arith.constant 0 : i32
    %c0_i32_2 = arith.constant 0 : i32
    return %arg0, %c0_i32, %c0_i32_0, %c0_i32_1 : i32, i32, i32, i32
  }
}

module attributes {stable_mosaic.version = 11 : i64} {
  func.func @_l2_proj_kernel(%arg0: i32, %arg1: i32, %arg2: memref<2x16x32xbf16, #tpu.memory_space<vmem>>, %arg3: memref<2x32x32xbf16, #tpu.memory_space<vmem>>, %arg4: memref<1x32xf32, #tpu.memory_space<vmem>>, %arg5: memref<2x1x2x32xbf16, #tpu.memory_space<vmem>>, %arg6: memref<2x32x32xbf16, #tpu.memory_space<vmem>>, %arg7: memref<1x32xf32, #tpu.memory_space<vmem>>, %arg8: memref<16x32xbf16, #tpu.memory_space<vmem>>, %arg9: memref<2x32xbf16, #tpu.memory_space<vmem>>) attributes {dimension_semantics = [#tpu.dimension_semantics<parallel>, #tpu.dimension_semantics<arbitrary>], iteration_bounds = array<i64: 1, 1>, scalar_prefetch = 0 : i64, scratch_operands = 0 : i64, tpu.core_type = #tpu.core_type<tc>, window_params = [{transform_indices = @transform_0, window_bounds = array<i64: 2, 16, 32>}, {transform_indices = @transform_1, window_bounds = array<i64: 2, 32, 32>}, {transform_indices = @transform_2, window_bounds = array<i64: 1, 32>}, {transform_indices = @transform_3, window_bounds = array<i64: 2, 1, 2, 32>}, {transform_indices = @transform_4, window_bounds = array<i64: 2, 32, 32>}, {transform_indices = @transform_5, window_bounds = array<i64: 1, 32>}, {transform_indices = @transform_6, window_bounds = array<i64: 16, 32>}, {transform_indices = @transform_7, window_bounds = array<i64: 2, 32>}]} {
    %c0 = arith.constant 0 : index
    %c0_0 = arith.constant 0 : index
    %c0_1 = arith.constant 0 : index
    %0 = vector.load %arg2[%c0, %c0_0, %c0_1] : memref<2x16x32xbf16, #tpu.memory_space<vmem>>, vector<1x16x32xbf16>
    %1 = vector.shape_cast %0 : vector<1x16x32xbf16> to vector<16x32xbf16>
    %c0_2 = arith.constant 0 : index
    %c0_3 = arith.constant 0 : index
    %c0_4 = arith.constant 0 : index
    %2 = vector.load %arg3[%c0_2, %c0_3, %c0_4] : memref<2x32x32xbf16, #tpu.memory_space<vmem>>, vector<1x32x32xbf16>
    %3 = vector.shape_cast %2 : vector<1x32x32xbf16> to vector<32x32xbf16>
    %cst = arith.constant dense<0.000000e+00> : vector<16x32xf32>
    %4 = tpu.matmul %1, %3, %cst {dimension_numbers = #tpu.dot_dimension_numbers<[1], [0], [0], [1], [0, 0, 1, 1], [], []>} : vector<16x32xbf16>, vector<32x32xbf16>, vector<16x32xf32> -> vector<16x32xf32>
    %c1 = arith.constant 1 : index
    %c0_5 = arith.constant 0 : index
    %c0_6 = arith.constant 0 : index
    %5 = vector.load %arg2[%c1, %c0_5, %c0_6] : memref<2x16x32xbf16, #tpu.memory_space<vmem>>, vector<1x16x32xbf16>
    %6 = vector.shape_cast %5 : vector<1x16x32xbf16> to vector<16x32xbf16>
    %c1_7 = arith.constant 1 : index
    %c0_8 = arith.constant 0 : index
    %c0_9 = arith.constant 0 : index
    %7 = vector.load %arg3[%c1_7, %c0_8, %c0_9] : memref<2x32x32xbf16, #tpu.memory_space<vmem>>, vector<1x32x32xbf16>
    %8 = vector.shape_cast %7 : vector<1x32x32xbf16> to vector<32x32xbf16>
    %cst_10 = arith.constant dense<0.000000e+00> : vector<16x32xf32>
    %9 = tpu.matmul %6, %8, %cst_10 {dimension_numbers = #tpu.dot_dimension_numbers<[1], [0], [0], [1], [0, 0, 1, 1], [], []>} : vector<16x32xbf16>, vector<32x32xbf16>, vector<16x32xf32> -> vector<16x32xf32>
    %10 = arith.addf %4, %9 : vector<16x32xf32>
    %c0_11 = arith.constant 0 : index
    %c0_12 = arith.constant 0 : index
    %11 = vector.load %arg4[%c0_11, %c0_12] : memref<1x32xf32, #tpu.memory_space<vmem>>, vector<1x32xf32>
    %12 = vector.broadcast %11 : vector<1x32xf32> to vector<16x32xf32>
    %13 = arith.addf %10, %12 : vector<16x32xf32>
    %14 = arith.truncf %13 : vector<16x32xf32> to vector<16x32xbf16>
    %c0_13 = arith.constant 0 : index
    %c0_14 = arith.constant 0 : index
    %15 = vector.load %arg8[%c0_13, %c0_14] : memref<16x32xbf16, #tpu.memory_space<vmem>>, vector<16x32xbf16>
    tpu.vector_store %arg8[%c0_13, %c0_14], %14 {strides = array<i32>} : memref<16x32xbf16, #tpu.memory_space<vmem>>, vector<16x32xbf16>,
    %c0_i32 = arith.constant 0 : i32
    %16 = arith.cmpi eq, %arg1, %c0_i32 : i32
    %17 = arith.extui %16 : i1 to i32
    %c0_i32_15 = arith.constant 0 : i32
    %18 = arith.cmpi ne, %17, %c0_i32_15 : i32
    scf.if %18 {
      %c0_16 = arith.constant 0 : index
      %c0_17 = arith.constant 0 : index
      %c0_18 = arith.constant 0 : index
      %c0_19 = arith.constant 0 : index
      %19 = vector.load %arg5[%c0_16, %c0_17, %c0_18, %c0_19] : memref<2x1x2x32xbf16, #tpu.memory_space<vmem>>, vector<1x1x2x32xbf16>
      %20 = vector.shape_cast %19 : vector<1x1x2x32xbf16> to vector<2x32xbf16>
      %c0_20 = arith.constant 0 : index
      %c0_21 = arith.constant 0 : index
      %c0_22 = arith.constant 0 : index
      %21 = vector.load %arg6[%c0_20, %c0_21, %c0_22] : memref<2x32x32xbf16, #tpu.memory_space<vmem>>, vector<1x32x32xbf16>
      %22 = vector.shape_cast %21 : vector<1x32x32xbf16> to vector<32x32xbf16>
      %cst_23 = arith.constant dense<0.000000e+00> : vector<2x32xf32>
      %23 = tpu.matmul %20, %22, %cst_23 {dimension_numbers = #tpu.dot_dimension_numbers<[1], [0], [0], [1], [0, 0, 1, 1], [], []>} : vector<2x32xbf16>, vector<32x32xbf16>, vector<2x32xf32> -> vector<2x32xf32>
      %c1_24 = arith.constant 1 : index
      %c0_25 = arith.constant 0 : index
      %c0_26 = arith.constant 0 : index
      %c0_27 = arith.constant 0 : index
      %24 = vector.load %arg5[%c1_24, %c0_25, %c0_26, %c0_27] : memref<2x1x2x32xbf16, #tpu.memory_space<vmem>>, vector<1x1x2x32xbf16>
      %25 = vector.shape_cast %24 : vector<1x1x2x32xbf16> to vector<2x32xbf16>
      %c1_28 = arith.constant 1 : index
      %c0_29 = arith.constant 0 : index
      %c0_30 = arith.constant 0 : index
      %26 = vector.load %arg6[%c1_28, %c0_29, %c0_30] : memref<2x32x32xbf16, #tpu.memory_space<vmem>>, vector<1x32x32xbf16>
      %27 = vector.shape_cast %26 : vector<1x32x32xbf16> to vector<32x32xbf16>
      %cst_31 = arith.constant dense<0.000000e+00> : vector<2x32xf32>
      %28 = tpu.matmul %25, %27, %cst_31 {dimension_numbers = #tpu.dot_dimension_numbers<[1], [0], [0], [1], [0, 0, 1, 1], [], []>} : vector<2x32xbf16>, vector<32x32xbf16>, vector<2x32xf32> -> vector<2x32xf32>
      %29 = arith.addf %23, %28 : vector<2x32xf32>
      %c0_32 = arith.constant 0 : index
      %c0_33 = arith.constant 0 : index
      %30 = vector.load %arg7[%c0_32, %c0_33] : memref<1x32xf32, #tpu.memory_space<vmem>>, vector<1x32xf32>
      %31 = vector.broadcast %30 : vector<1x32xf32> to vector<2x32xf32>
      %32 = arith.addf %29, %31 : vector<2x32xf32>
      %cst_34 = arith.constant 0.000000e+00 : f32
      %33 = vector.broadcast %cst_34 : f32 to vector<2x32xf32>
      %34 = arith.maximumf %32, %33 : vector<2x32xf32>
      %35 = arith.truncf %34 : vector<2x32xf32> to vector<2x32xbf16>
      %c0_35 = arith.constant 0 : index
      %c0_36 = arith.constant 0 : index
      %36 = vector.load %arg9[%c0_35, %c0_36] : memref<2x32xbf16, #tpu.memory_space<vmem>>, vector<2x32xbf16>
      tpu.vector_store %arg9[%c0_35, %c0_36], %35 {strides = array<i32>} : memref<2x32xbf16, #tpu.memory_space<vmem>>, vector<2x32xbf16>,
    } else {
    }
    return
  }
  func.func @transform_0(%arg0: i32, %arg1: i32) -> (i32, i32, i32) {
    %c0_i32 = arith.constant 0 : i32
    %c0_i32_0 = arith.constant 0 : i32
    %c0_i32_1 = arith.constant 0 : i32
    return %c0_i32, %arg1, %c0_i32_0 : i32, i32, i32
  }
  func.func @transform_1(%arg0: i32, %arg1: i32) -> (i32, i32, i32) {
    %c0_i32 = arith.constant 0 : i32
    %c0_i32_0 = arith.constant 0 : i32
    %c0_i32_1 = arith.constant 0 : i32
    return %c0_i32, %c0_i32_0, %arg0 : i32, i32, i32
  }
  func.func @transform_2(%arg0: i32, %arg1: i32) -> (i32, i32) {
    %c0_i32 = arith.constant 0 : i32
    %c0_i32_0 = arith.constant 0 : i32
    return %c0_i32, %arg0 : i32, i32
  }
  func.func @transform_3(%arg0: i32, %arg1: i32) -> (i32, i32, i32, i32) {
    %c0_i32 = arith.constant 0 : i32
    %c7_i32 = arith.constant 7 : i32
    %c0_i32_0 = arith.constant 0 : i32
    %c0_i32_1 = arith.constant 0 : i32
    %c0_i32_2 = arith.constant 0 : i32
    return %c0_i32, %c7_i32, %c0_i32_0, %c0_i32_1 : i32, i32, i32, i32
  }
  func.func @transform_4(%arg0: i32, %arg1: i32) -> (i32, i32, i32) {
    %c0_i32 = arith.constant 0 : i32
    %c0_i32_0 = arith.constant 0 : i32
    %c0_i32_1 = arith.constant 0 : i32
    return %c0_i32, %c0_i32_0, %arg0 : i32, i32, i32
  }
  func.func @transform_5(%arg0: i32, %arg1: i32) -> (i32, i32) {
    %c0_i32 = arith.constant 0 : i32
    %c0_i32_0 = arith.constant 0 : i32
    return %c0_i32, %arg0 : i32, i32
  }
  func.func @transform_6(%arg0: i32, %arg1: i32) -> (i32, i32) {
    %c0_i32 = arith.constant 0 : i32
    return %arg1, %arg0 : i32, i32
  }
  func.func @transform_7(%arg0: i32, %arg1: i32) -> (i32, i32) {
    %c0_i32 = arith.constant 0 : i32
    %c0_i32_0 = arith.constant 0 : i32
    return %c0_i32, %arg0 : i32, i32
  }
}

module attributes {stable_mosaic.version = 11 : i64} {
  func.func @_l2_rec_heads_kernel(%arg0: i32, %arg1: memref<8x2x32xbf16, #tpu.memory_space<vmem>>, %arg2: memref<32x32xbf16, #tpu.memory_space<any>>, %arg3: memref<2x32xbf16, #tpu.memory_space<vmem>>, %arg4: memref<2x32x16xbf16, #tpu.memory_space<vmem>>, %arg5: memref<1x16xf32, #tpu.memory_space<vmem>>, %arg6: memref<2x8xf32, #tpu.memory_space<vmem>>, %arg7: memref<2x8xf32, #tpu.memory_space<vmem>>, %arg8: memref<2x32xbf16, #tpu.memory_space<vmem>>, %arg9: memref<32x32xbf16, #tpu.memory_space<vmem>>, %arg10: memref<1x!tpu.dma_semaphore, #tpu.memory_space<semaphore_mem>>) attributes {dimension_semantics = [#tpu.dimension_semantics<arbitrary>], iteration_bounds = array<i64: 1>, scalar_prefetch = 0 : i64, scratch_operands = 3 : i64, tpu.core_type = #tpu.core_type<tc>, window_params = [{pipeline_mode = #tpu.pipeline_mode<synchronous>, transform_indices = @transform_0, window_bounds = array<i64: 8, 2, 32>}, {}, {pipeline_mode = #tpu.pipeline_mode<synchronous>, transform_indices = @transform_2, window_bounds = array<i64: 2, 32>}, {pipeline_mode = #tpu.pipeline_mode<synchronous>, transform_indices = @transform_3, window_bounds = array<i64: 2, 32, 16>}, {pipeline_mode = #tpu.pipeline_mode<synchronous>, transform_indices = @transform_4, window_bounds = array<i64: 1, 16>}, {pipeline_mode = #tpu.pipeline_mode<synchronous>, transform_indices = @transform_5, window_bounds = array<i64: 2, 8>}, {pipeline_mode = #tpu.pipeline_mode<synchronous>, transform_indices = @transform_6, window_bounds = array<i64: 2, 8>}]} {
    %c0_i32 = arith.constant 0 : i32
    %0 = tpu.memref_slice %arg10[%c0_i32] : memref<1x!tpu.dma_semaphore, #tpu.memory_space<semaphore_mem>> -> memref<1x!tpu.dma_semaphore, #tpu.memory_space<semaphore_mem>>
    %1 = tpu.memref_squeeze %0 : memref<1x!tpu.dma_semaphore, #tpu.memory_space<semaphore_mem>> -> memref<!tpu.dma_semaphore, #tpu.memory_space<semaphore_mem>>
    tpu.enqueue_dma source(%arg2 : memref<32x32xbf16, #tpu.memory_space<any>>) target(%arg9 : memref<32x32xbf16, #tpu.memory_space<vmem>>) target_semaphore(%1 : memref<!tpu.dma_semaphore, #tpu.memory_space<semaphore_mem>>)
    %c0 = arith.constant 0 : index
    %c0_0 = arith.constant 0 : index
    %c0_1 = arith.constant 0 : index
    %2 = vector.load %arg1[%c0, %c0_0, %c0_1] : memref<8x2x32xbf16, #tpu.memory_space<vmem>>, vector<1x2x32xbf16>
    %3 = vector.shape_cast %2 : vector<1x2x32xbf16> to vector<2x32xbf16>
    %4 = arith.extf %3 : vector<2x32xbf16> to vector<2x32xf32>
    %cst = arith.constant 0.000000e+00 : f32
    %5 = vector.broadcast %cst : f32 to vector<2x32xf32>
    %6 = arith.maximumf %4, %5 : vector<2x32xf32>
    %7 = arith.truncf %6 : vector<2x32xf32> to vector<2x32xbf16>
    %c0_2 = arith.constant 0 : index
    %c0_3 = arith.constant 0 : index
    %8 = vector.load %arg8[%c0_2, %c0_3] : memref<2x32xbf16, #tpu.memory_space<vmem>>, vector<2x32xbf16>
    tpu.vector_store %arg8[%c0_2, %c0_3], %7 {strides = array<i32>} : memref<2x32xbf16, #tpu.memory_space<vmem>>, vector<2x32xbf16>,
    %c0_i32_4 = arith.constant 0 : i32
    %9 = tpu.memref_slice %arg10[%c0_i32_4] : memref<1x!tpu.dma_semaphore, #tpu.memory_space<semaphore_mem>> -> memref<1x!tpu.dma_semaphore, #tpu.memory_space<semaphore_mem>>
    %10 = tpu.memref_squeeze %9 : memref<1x!tpu.dma_semaphore, #tpu.memory_space<semaphore_mem>> -> memref<!tpu.dma_semaphore, #tpu.memory_space<semaphore_mem>>
    tpu.wait_dma2 semaphore(%10 : memref<!tpu.dma_semaphore, #tpu.memory_space<semaphore_mem>>) src(%arg2 : memref<32x32xbf16, #tpu.memory_space<any>>) dst(%arg9 : memref<32x32xbf16, #tpu.memory_space<vmem>>)
    %c0_i32_5 = arith.constant 0 : i32
    %c7_i32 = arith.constant 7 : i32
    %11 = arith.addi %c0_i32_5, %c7_i32 : i32
    %c1_i32 = arith.constant 1 : i32
    scf.for %arg11 = %c0_i32_5 to %11 step %c1_i32  : i32 {
      %c1_i32_27 = arith.constant 1 : i32
      %44 = arith.muli %arg11, %c1_i32_27 : i32
      %c1_i32_28 = arith.constant 1 : i32
      %45 = arith.addi %c1_i32_28, %44 : i32
      %46 = arith.index_cast %45 : i32 to index
      %c0_29 = arith.constant 0 : index
      %c0_30 = arith.constant 0 : index
      %47 = vector.load %arg1[%46, %c0_29, %c0_30] : memref<8x2x32xbf16, #tpu.memory_space<vmem>>, vector<1x2x32xbf16>
      %48 = vector.shape_cast %47 : vector<1x2x32xbf16> to vector<2x32xbf16>
      %49 = arith.extf %48 : vector<2x32xbf16> to vector<2x32xf32>
      %c0_31 = arith.constant 0 : index
      %c0_32 = arith.constant 0 : index
      %50 = vector.load %arg8[%c0_31, %c0_32] : memref<2x32xbf16, #tpu.memory_space<vmem>>, vector<2x32xbf16>
      %c0_33 = arith.constant 0 : index
      %c0_34 = arith.constant 0 : index
      %51 = vector.load %arg9[%c0_33, %c0_34] : memref<32x32xbf16, #tpu.memory_space<vmem>>, vector<32x32xbf16>
      %cst_35 = arith.constant dense<0.000000e+00> : vector<2x32xf32>
      %52 = tpu.matmul %50, %51, %cst_35 {dimension_numbers = #tpu.dot_dimension_numbers<[1], [0], [0], [1], [0, 0, 1, 1], [], []>} : vector<2x32xbf16>, vector<32x32xbf16>, vector<2x32xf32> -> vector<2x32xf32>
      %53 = arith.addf %49, %52 : vector<2x32xf32>
      %cst_36 = arith.constant 0.000000e+00 : f32
      %54 = vector.broadcast %cst_36 : f32 to vector<2x32xf32>
      %55 = arith.maximumf %53, %54 : vector<2x32xf32>
      %56 = arith.truncf %55 : vector<2x32xf32> to vector<2x32xbf16>
      %c0_37 = arith.constant 0 : index
      %c0_38 = arith.constant 0 : index
      %57 = vector.load %arg8[%c0_37, %c0_38] : memref<2x32xbf16, #tpu.memory_space<vmem>>, vector<2x32xbf16>
      tpu.vector_store %arg8[%c0_37, %c0_38], %56 {strides = array<i32>} : memref<2x32xbf16, #tpu.memory_space<vmem>>, vector<2x32xbf16>,
    }
    %c7_i32_6 = arith.constant 7 : i32
    %c0_7 = arith.constant 0 : index
    %c0_8 = arith.constant 0 : index
    %12 = vector.load %arg8[%c0_7, %c0_8] : memref<2x32xbf16, #tpu.memory_space<vmem>>, vector<2x32xbf16>
    %c0_9 = arith.constant 0 : index
    %c0_10 = arith.constant 0 : index
    %c0_11 = arith.constant 0 : index
    %13 = vector.load %arg4[%c0_9, %c0_10, %c0_11] : memref<2x32x16xbf16, #tpu.memory_space<vmem>>, vector<1x32x16xbf16>
    %14 = vector.shape_cast %13 : vector<1x32x16xbf16> to vector<32x16xbf16>
    %cst_12 = arith.constant dense<0.000000e+00> : vector<2x16xf32>
    %15 = tpu.matmul %12, %14, %cst_12 {dimension_numbers = #tpu.dot_dimension_numbers<[1], [0], [0], [1], [0, 0, 1, 1], [], []>} : vector<2x32xbf16>, vector<32x16xbf16>, vector<2x16xf32> -> vector<2x16xf32>
    %c0_13 = arith.constant 0 : index
    %c0_14 = arith.constant 0 : index
    %16 = vector.load %arg3[%c0_13, %c0_14] : memref<2x32xbf16, #tpu.memory_space<vmem>>, vector<2x32xbf16>
    %c1 = arith.constant 1 : index
    %c0_15 = arith.constant 0 : index
    %c0_16 = arith.constant 0 : index
    %17 = vector.load %arg4[%c1, %c0_15, %c0_16] : memref<2x32x16xbf16, #tpu.memory_space<vmem>>, vector<1x32x16xbf16>
    %18 = vector.shape_cast %17 : vector<1x32x16xbf16> to vector<32x16xbf16>
    %cst_17 = arith.constant dense<0.000000e+00> : vector<2x16xf32>
    %19 = tpu.matmul %16, %18, %cst_17 {dimension_numbers = #tpu.dot_dimension_numbers<[1], [0], [0], [1], [0, 0, 1, 1], [], []>} : vector<2x32xbf16>, vector<32x16xbf16>, vector<2x16xf32> -> vector<2x16xf32>
    %20 = arith.addf %15, %19 : vector<2x16xf32>
    %c0_18 = arith.constant 0 : index
    %c0_19 = arith.constant 0 : index
    %21 = vector.load %arg5[%c0_18, %c0_19] : memref<1x16xf32, #tpu.memory_space<vmem>>, vector<1x16xf32>
    %22 = vector.broadcast %21 : vector<1x16xf32> to vector<2x16xf32>
    %23 = arith.addf %20, %22 : vector<2x16xf32>
    %24 = vector.extract_strided_slice %23 {offsets = [0, 0], sizes = [2, 8], strides = [1, 1]} : vector<2x16xf32> to vector<2x8xf32>
    %c0_20 = arith.constant 0 : index
    %c0_21 = arith.constant 0 : index
    %25 = vector.load %arg6[%c0_20, %c0_21] : memref<2x8xf32, #tpu.memory_space<vmem>>, vector<2x8xf32>
    tpu.vector_store %arg6[%c0_20, %c0_21], %24 {strides = array<i32>} : memref<2x8xf32, #tpu.memory_space<vmem>>, vector<2x8xf32>,
    %26 = vector.extract_strided_slice %23 {offsets = [0, 8], sizes = [2, 8], strides = [1, 1]} : vector<2x16xf32> to vector<2x8xf32>
    %cst_22 = arith.constant 0.000000e+00 : f32
    %27 = vector.broadcast %cst_22 : f32 to vector<2x8xf32>
    %28 = arith.maximumf %26, %27 : vector<2x8xf32>
    %29 = vector.broadcast %cst_22 : f32 to vector<2x8xf32>
    %30 = arith.subf %26, %29 : vector<2x8xf32>
    %31 = arith.cmpf one, %30, %30 : vector<2x8xf32>
    %32 = vector.broadcast %cst_22 : f32 to vector<2x8xf32>
    %33 = arith.addf %26, %32 : vector<2x8xf32>
    %34 = math.absf %30 : vector<2x8xf32>
    %cst_23 = arith.constant 0.000000e+00 : f32
    %35 = vector.broadcast %cst_23 : f32 to vector<2x8xf32>
    %36 = arith.subf %35, %34 : vector<2x8xf32>
    %37 = math.exp %36 : vector<2x8xf32>
    %38 = math.log1p %37 : vector<2x8xf32>
    %39 = arith.addf %28, %38 : vector<2x8xf32>
    %40 = arith.select %31, %33, %39 : vector<2x8xi1>, vector<2x8xf32>
    %cst_24 = arith.constant 1.000000e-03 : f32
    %41 = vector.broadcast %cst_24 : f32 to vector<2x8xf32>
    %42 = arith.addf %40, %41 : vector<2x8xf32>
    %c0_25 = arith.constant 0 : index
    %c0_26 = arith.constant 0 : index
    %43 = vector.load %arg7[%c0_25, %c0_26] : memref<2x8xf32, #tpu.memory_space<vmem>>, vector<2x8xf32>
    tpu.vector_store %arg7[%c0_25, %c0_26], %42 {strides = array<i32>} : memref<2x8xf32, #tpu.memory_space<vmem>>, vector<2x8xf32>,
    return
  }
  func.func @transform_0(%arg0: i32) -> (i32, i32, i32) {
    %c0_i32 = arith.constant 0 : i32
    %c0_i32_0 = arith.constant 0 : i32
    %c0_i32_1 = arith.constant 0 : i32
    %c0_i32_2 = arith.constant 0 : i32
    return %c0_i32, %c0_i32_0, %c0_i32_1 : i32, i32, i32
  }
  func.func @transform_2(%arg0: i32) -> (i32, i32) {
    %c0_i32 = arith.constant 0 : i32
    %c0_i32_0 = arith.constant 0 : i32
    %c0_i32_1 = arith.constant 0 : i32
    return %c0_i32, %c0_i32_0 : i32, i32
  }
  func.func @transform_3(%arg0: i32) -> (i32, i32, i32) {
    %c0_i32 = arith.constant 0 : i32
    %c0_i32_0 = arith.constant 0 : i32
    %c0_i32_1 = arith.constant 0 : i32
    %c0_i32_2 = arith.constant 0 : i32
    return %c0_i32, %c0_i32_0, %c0_i32_1 : i32, i32, i32
  }
  func.func @transform_4(%arg0: i32) -> (i32, i32) {
    %c0_i32 = arith.constant 0 : i32
    %c0_i32_0 = arith.constant 0 : i32
    %c0_i32_1 = arith.constant 0 : i32
    return %c0_i32, %c0_i32_0 : i32, i32
  }
  func.func @transform_5(%arg0: i32) -> (i32, i32) {
    %c0_i32 = arith.constant 0 : i32
    %c0_i32_0 = arith.constant 0 : i32
    %c0_i32_1 = arith.constant 0 : i32
    return %c0_i32, %c0_i32_0 : i32, i32
  }
  func.func @transform_6(%arg0: i32) -> (i32, i32) {
    %c0_i32 = arith.constant 0 : i32
    %c0_i32_0 = arith.constant 0 : i32
    %c0_i32_1 = arith.constant 0 : i32
    return %c0_i32, %c0_i32_0 : i32, i32
  }
}

</mosaic_0001>

<llo_original>
// kernel: plan_recognition_forward.3
$region0: #{plan_recognition_forward.3}
  #allocation0 [shape = 'u32[]', space=smem, size = 0x4, offset = 0x4, fixed_abs, tag = 'smem constant byte address 0x4 - core index']
  #allocation1 [shape = 'u32[144,128]{1,0:T(1,128)}', space=vmem, size = 0x12000, scoped, tag = 'internal scratch']
  #allocation2 [shape = 'f32[8,2,32]{2,1,0:T(2,128)}', space=vmem, size = 0x2000, scoped, tag = 'scratch operand']
  #allocation3 [shape = 'bf16[2,32]{1,0:T(2,128)(2,1)}', space=vmem, size = 0x200, scoped, tag = 'scratch operand']
  #allocation4 [shape = 'bf16[32,32]{1,0:T(8,128)(2,1)}', space=vmem, size = 0x2000, scoped, tag = 'scratch operand']
  #allocation5 [shape = 's32[1]{0}', space=sflag, size = 0x4, scoped, tag = 'scratch operand']
  #allocation6 [shape = 's32[]', space=sflag, size = 0x4, offset = 0, fixed_abs, tag = 'sflag constant byte address 0x0 - dummy sync flag']
  #allocation7 [shape = 's32[]', space=sflag, size = 0x4, offset = 0, fixed_abs, tag = 'sflag constant byte address 0x0 - dummy sync flag']
  #allocation8 [shape = 'u32[]', space=smem, size = 0x4, offset = 0x44, fixed_abs, tag = 'smem constant byte address 0x44 - assertion arg 0']
  #allocation9 [shape = 'u32[]', space=smem, size = 0x4, offset = 0x48, fixed_abs, tag = 'smem constant byte address 0x48 - assertion arg 1']
  %s0 = inlined_call_operand.vmem [shape: bf16[8,2,16], index: 0, kind: input, shape index: {}]
  %s1 = inlined_call_operand.vmem [shape: bf16[2,16,32], index: 1, kind: input, shape index: {}]
  %s2 = inlined_call_operand.vmem [shape: f32[2,1,32], index: 2, kind: input, shape index: {}]
  %s3 = inlined_call_operand.hbm [shape: bf16[2,32,32], index: 3, kind: input, shape index: {}]
  %s4 = inlined_call_operand.vmem [shape: bf16[2,8,2,32], index: 4, kind: output, shape index: {}]
  %s5 = sld [smem:[#allocation0]]
  $region63: #{plan_recognition_forward.3} parent=0
    _
  %s7 = ssub.s32 1, %s5
  %s8 = scalar_select 0, %s7, %s5
  loop: start=0, step=1, limit=4
  $region2: #{plan_recognition_forward.3} parent=0 // loop_pre_header
    _
  $region3: #{plan_recognition_forward.3} parent=0 // loop_header
    %s10 = sphi 0, %s14
    %p11 = scmp.ge.s32.totalorder %s10, 4
    %s18 = sphi 0, %s18
    %s20 = sphi 0, %s18
    %s21 = sphi 0, %s20
    %s35 = sphi 0, %s21
    %s41 = sphi 0, %s43
    %s44 = sphi 0, %s41
    %s45 = sphi 0, %s44
    %s61 = sphi 0, %s45
    %s67 = sphi 0, %s69
    %s70 = sphi 0, %s67
    %s71 = sphi 0, %s70
    %s87 = sphi 0, %s71
    %s93 = sphi 0, %s95
    %s96 = sphi 0, %s93
    %s97 = sphi 0, %s96
    %s113 = sphi 0, %s97
  $region4: #{plan_recognition_forward.3} parent=0 // loop_header_branch
    %13 = sbr.rel (%p11) target = $region8
  $region5: #{plan_recognition_forward.3} parent=0 // loop_body
    %s15 = ssub.s32 %s10, 1
    %s16 = ssub.s32 %s10, 2
    %s17 = sadd.s32 %s10, 1
    %s19 = sadd.s32 %s18, 1
    %p22 = scmp.eq.s32.totalorder %s10, 1
    %p23 = scmp.ne.s32.totalorder %s18, %s20
    %p24 = scmp.eq.s32.totalorder %s10, 0
    %p25 = por %p23, %p24
    %p26 = scmp.ne.s32.totalorder %s18, %s20
    %p27 = scmp.eq.s32.totalorder %s15, 1
    %p28 = por %p26, %p27
    %p29 = scmp.ne.s32.totalorder %s20, %s21
    %p30 = scmp.eq.s32.totalorder %s15, 0
    %p31 = por %p29, %p30
    %p32 = scmp.ne.s32.totalorder %s20, %s21
    %p33 = scmp.eq.s32.totalorder %s16, 1
    %p34 = por %p32, %p33
    %p36 = scmp.ne.s32.totalorder %s21, %s35
    %p37 = scmp.eq.s32.totalorder %s16, 0
    %p38 = por %p36, %p37
    %s39 = ssub.s32 %s10, %s17
    %p40 = scmp.eq.s32.totalorder %s39, 0
    %s42 = sadd.s32 %s41, 1
    %s43 = scalar_select %p40, %s41, %s42
    %p46 = pneg %p40
    %p47 = scmp.eq.s32.totalorder %s10, 1
    %p48 = por %p46, %p47
    %p49 = scmp.ne.s32.totalorder %s41, %s44
    %p50 = scmp.eq.s32.totalorder %s10, 0
    %p51 = por %p49, %p50
    %p52 = scmp.ne.s32.totalorder %s41, %s44
    %p53 = scmp.eq.s32.totalorder %s15, 1
    %p54 = por %p52, %p53
    %p55 = scmp.ne.s32.totalorder %s44, %s45
    %p56 = scmp.eq.s32.totalorder %s15, 0
    %p57 = por %p55, %p56
    %p58 = scmp.ne.s32.totalorder %s44, %s45
    %p59 = scmp.eq.s32.totalorder %s16, 1
    %p60 = por %p58, %p59
    %p62 = scmp.ne.s32.totalorder %s45, %s61
    %p63 = scmp.eq.s32.totalorder %s16, 0
    %p64 = por %p62, %p63
    %s65 = ssub.s32 %s10, %s17
    %p66 = scmp.eq.s32.totalorder %s65, 0
    %s68 = sadd.s32 %s67, 1
    %s69 = scalar_select %p66, %s67, %s68
    %p72 = pneg %p66
    %p73 = scmp.eq.s32.totalorder %s10, 1
    %p74 = por %p72, %p73
    %p75 = scmp.ne.s32.totalorder %s67, %s70
    %p76 = scmp.eq.s32.totalorder %s10, 0
    %p77 = por %p75, %p76
    %p78 = scmp.ne.s32.totalorder %s67, %s70
    %p79 = scmp.eq.s32.totalorder %s15, 1
    %p80 = por %p78, %p79
    %p81 = scmp.ne.s32.totalorder %s70, %s71
    %p82 = scmp.eq.s32.totalorder %s15, 0
    %p83 = por %p81, %p82
    %p84 = scmp.ne.s32.totalorder %s70, %s71
    %p85 = scmp.eq.s32.totalorder %s16, 1
    %p86 = por %p84, %p85
    %p88 = scmp.ne.s32.totalorder %s71, %s87
    %p89 = scmp.eq.s32.totalorder %s16, 0
    %p90 = por %p88, %p89
    %s91 = ssub.s32 %s10, %s17
    %p92 = scmp.eq.s32.totalorder %s91, 0
    %s94 = sadd.s32 %s93, 1
    %s95 = scalar_select %p92, %s93, %s94
    %p98 = pneg %p92
    %p99 = scmp.eq.s32.totalorder %s10, 1
    %p100 = por %p98, %p99
    %p101 = scmp.ne.s32.totalorder %s93, %s96
    %p102 = scmp.eq.s32.totalorder %s10, 0
    %p103 = por %p101, %p102
    %p104 = scmp.ne.s32.totalorder %s93, %s96
    %p105 = scmp.eq.s32.totalorder %s15, 1
    %p106 = por %p104, %p105
    %p107 = scmp.ne.s32.totalorder %s96, %s97
    %p108 = scmp.eq.s32.totalorder %s15, 0
    %p109 = por %p107, %p108
    %p110 = scmp.ne.s32.totalorder %s96, %s97
    %p111 = scmp.eq.s32.totalorder %s16, 1
    %p112 = por %p110, %p111
    %p114 = scmp.ne.s32.totalorder %s97, %s113
    %p115 = scmp.eq.s32.totalorder %s16, 0
    %p116 = por %p114, %p115
    %p117 = scmp.le.s32.totalorder 1, %s10
    %p118 = scmp.lt.s32.totalorder %s10, 3
    %p119 = pnand %p117, %p118
    %p120 = pneg %p119
    // Predicated region
    $region9: #{plan_recognition_forward.3} parent=5 // pred_check
      _
    $region10: #{plan_recognition_forward.3} parent=5 // pred_check_branch
      %122 = sbr.rel (%p119) target = $region12
    $region11: #{plan_recognition_forward.3} parent=5 // pred_region
      %s123 = ssub.s32 %s10, 1
      // Predicated region
      $region13: #{plan_recognition_forward.3} parent=11 // pred_check
        %p124 = pneg %p31
      $region14: #{plan_recognition_forward.3} parent=11 // pred_check_branch
        %126 = sbr.rel (%p124) target = $region16
      $region15: #{plan_recognition_forward.3} parent=11 // pred_region
        _
      $region16: #{plan_recognition_forward.3} parent=11 // pred_fallthru
        _
    $region12: #{plan_recognition_forward.3} parent=5 // pred_fallthru
      _
    %p127 = scmp.lt.s32.totalorder %s10, 2
    // Predicated region
    $region17: #{plan_recognition_forward.3} parent=5 // pred_check
      %p128 = pneg %p127
    $region18: #{plan_recognition_forward.3} parent=5 // pred_check_branch
      %130 = sbr.rel (%p128) target = $region20
    $region19: #{plan_recognition_forward.3} parent=5 // pred_region
      // Predicated region
      $region21: #{plan_recognition_forward.3} parent=19 // pred_check
        %p131 = pneg %p51
      $region22: #{plan_recognition_forward.3} parent=19 // pred_check_branch
        %133 = sbr.rel (%p131) target = $region24
      $region23: #{plan_recognition_forward.3} parent=19 // pred_region
        %p134 = scmp.lt.s32.totalorder %s10, 1
        %s135 = scalar_select %p134, %s10, 1
        %s136 = smul.addr %s135, 2
        %s137 = smul.addr %s136, 4
        %s138 = scalar_lea.vmem %s1, %s137
      $region24: #{plan_recognition_forward.3} parent=19 // pred_fallthru
        _
      // Predicated region
      $region25: #{plan_recognition_forward.3} parent=19 // pred_check
        %p139 = pneg %p77
      $region26: #{plan_recognition_forward.3} parent=19 // pred_check_branch
        %141 = sbr.rel (%p139) target = $region28
      $region27: #{plan_recognition_forward.3} parent=19 // pred_region
        %p142 = scmp.lt.s32.totalorder %s10, 1
        %s143 = scalar_select %p142, %s10, 1
        %s144 = scalar_lea.vmem %s2, %s143
      $region28: #{plan_recognition_forward.3} parent=19 // pred_fallthru
        _
    $region20: #{plan_recognition_forward.3} parent=5 // pred_fallthru
      _
    %p145 = scmp.le.s32.totalorder 1, %s10
    %p146 = scmp.lt.s32.totalorder %s10, 3
    %p147 = pnand %p145, %p146
    %p148 = pneg %p147
    // Predicated region
    $region29: #{plan_recognition_forward.3} parent=5 // pred_check
      _
    $region30: #{plan_recognition_forward.3} parent=5 // pred_check_branch
      %150 = sbr.rel (%p147) target = $region32
    $region31: #{plan_recognition_forward.3} parent=5 // pred_region
      %s151 = ssub.s32 %s10, 1
      %p152 = pneg %p31
      %p153 = pneg %p28
      %p154 = scmp.lt.s32.totalorder %s15, 1
      %s155 = scalar_select %p154, %s15, 1
      %s156 = smul.addr %s155, 2
      %s157 = smul.addr %s156, 4
      %s158 = scalar_lea.vmem %s1, %s157
      %p159 = pneg %p57
      %p160 = pneg %p54
      %p161 = scmp.lt.s32.totalorder %s15, 1
      %s162 = scalar_select %p161, %s15, 1
      %s163 = scalar_lea.vmem %s2, %s162
      %p164 = pneg %p83
      %p165 = pneg %p80
      %p166 = pneg %p109
      %p167 = pneg %p106
      %p168 = scmp.lt.s32.totalorder %s15, 1
      %s169 = scalar_select %p168, %s15, 1
      %s170 = smul.addr %s169, 8
      %s171 = scalar_lea.vmem %s4, %s170
      %p172 = scmp.lt.s32.totalorder %s15, 1
      %s173 = scalar_select %p172, %s15, 1
      %s174 = smul.addr %s173, 2
      %s175 = smul.addr %s174, 4
      %s176 = scalar_lea.vmem %s1, %s175
      %p177 = scmp.lt.s32.totalorder %s15, 1
      %s178 = scalar_select %p177, %s15, 1
      %s179 = scalar_lea.vmem %s2, %s178
      %p180 = scmp.lt.s32.totalorder %s15, 1
      %s181 = scalar_select %p180, %s15, 1
      %s182 = smul.addr %s181, 8
      %s183 = scalar_lea.vmem %s4, %s182
      %s185 = smul.u32 %s15, 4
      %s186 = smul.addr %s185, 64
      %s187 = scalar_lea.hbm %s3, %s186
      // Predicated region
      $region33: #{plan_recognition_forward.3} parent=31 // pred_check
        _
      $region34: #{plan_recognition_forward.3} parent=31 // pred_check_branch
        %189 = sbr.rel target = $region36
      $region35: #{plan_recognition_forward.3} parent=31 // pred_region
        %190 = sst [smem:[#allocation8]] [#allocation7]
        %191 = sst [smem:[#allocation9]] [#allocation6]
      $region36: #{plan_recognition_forward.3} parent=31 // pred_fallthru
        _
      %193 = shalt.err (0)
      %s195 = sshll.u32 [#allocation4], 4
      %s196 = int_to_ptr.vmem [resolvable:$true] %s195
      %198 = dma.hbm_to_vmem [thread:$0]  %s187, 256, %s196, [#allocation5]
      loop: start=0, step=1, limit=8
      $region37: #{plan_recognition_forward.3} parent=31 // loop_pre_header
        _
      $region38: #{plan_recognition_forward.3} parent=31 // loop_header
        %s200 = sphi 0, %s204
        %p201 = scmp.ge.s32.totalorder %s200, 8
      $region39: #{plan_recognition_forward.3} parent=31 // loop_header_branch
        %203 = sbr.rel (%p201) target = $region43
      $region40: #{plan_recognition_forward.3} parent=31 // loop_body
        %s205 = scalar_lea.vmem %s0, %s200
        %v206 = vld [vmem:[%s205] sm:$0x1]
        %v207 = vld [vmem:[%s176] sm:$0xf]
        %v208 = vld [vmem:[%s176 + $0x4] sm:$0xf]
        %v209 = vld [vmem:[%s179] sm:$0x1]
        %v211 = vlaneseq
        %v212 = vshrl.u32 %v211, 7
        %v213 = vsub.s32 0, %v212
        %v214 = vrot.slane %v209, %v213
        %v218 = vunpack.c.l.b16 %v207
        %v219 = vunpack.c.l.b16 %v208
        %v220 = vpack.c.b16 %v219, %v218
        %vm222 = vcmask 130048
        %v224 = vsel %vm222, %v206, 0
        %226 = vmatprep.subr.bf16.mxu0 0
        %227 = vmatpush1.bf16.msra.mxu0 0
        %228 = vmatprep.subr.bf16.mxu0 0
        %229 = vmatpush1.bf16.msra.mxu0 0
        %230 = vmatprep.subr.bf16.mxu0 0
        %231 = vmatpush1.bf16.msra.mxu0 0
        %232 = vmatprep.subr.bf16.mxu0 0
        %233 = vmatpush1.bf16.msra.mxu0 0
        %234 = vmatprep.subr.bf16.mxu0 0
        %235 = vmatpush1.bf16.msra.mxu0 0
        %236 = vmatprep.subr.bf16.mxu0 0
        %237 = vmatpush1.bf16.msra.mxu0 0
        %238 = vmatprep.subr.bf16.mxu0 0
        %239 = vmatpush1.bf16.msra.mxu0 0
        %240 = vmatprep.subr.bf16.mxu0 0
        %241 = vmatpush1.bf16.msra.mxu0 %v220
        %242 = vmatprep.subr.bf16.mxu0 0
        %243 = vmatpush2.bf16.msra.mxu0 0
        %244 = vmatprep.subr.bf16.mxu0 0
        %245 = vmatpush2.bf16.msra.mxu0 0
        %246 = vmatprep.subr.bf16.mxu0 0
        %247 = vmatpush2.bf16.msra.mxu0 0
        %248 = vmatprep.subr.bf16.mxu0 0
        %249 = vmatpush2.bf16.msra.mxu0 0
        %250 = vmatprep.subr.bf16.mxu0 0
        %251 = vmatpush2.bf16.msra.mxu0 0
        %252 = vmatprep.subr.bf16.mxu0 0
        %253 = vmatpush2.bf16.msra.mxu0 0
        %254 = vmatprep.subr.bf16.mxu0 0
        %255 = vmatpush2.bf16.msra.mxu0 0
        %256 = vmatprep.subr.bf16.mxu0 0
        %257 = vmatpush2.bf16.msra.mxu0 0
        %258 = vmatprep.mubr.bf16.mxu0 0
        %259 = vmatmul.mubr.bf16.gmra.mxu0 %v224
        %v260 = vpop.f32.mrf.mxu0
        %v261 = vadd.f32 %v214, %v260
        %v262 = vpop.f32.mrf.mxu0
        %v263 = vpop.f32.mrf.mxu0
        %v264 = vpop.f32.mrf.mxu0
        %265 = vdwg.mxu0
        %s266 = smul.u32 %s200, 2
        %s267 = scalar_lea.vmem [#allocation2], %s266
        %vm268 = vcmask 254976
        %269 = vst.msk [vmem:[%s267] sm:$0x3] %vm268, %v261
      $region41: #{plan_recognition_forward.3} parent=31 // loop_footer
        %s204 = sadd.s32 1, %s200
      $region42: #{plan_recognition_forward.3} parent=31 // loop_footer_branch
        %199 = sbr.rel target = $region38
      $region43: #{plan_recognition_forward.3} parent=31 // loop_exit
        _
      %s270 = smul.u32 %s15, 7
      %s271 = smul.u32 %s270, 2
      %s272 = scalar_lea.vmem [#allocation2], %s271
      %v273 = vld [vmem:[%s272] sm:$0x3]
      %v274 = vmax.f32 %v273, 0.0
      %v275 = vpack.c.bf16 %v274, %v274
      %vm276 = vcmask 253952
      %277 = vst.msk [vmem:[#allocation3] sm:$0x1] %vm276, %v275
      %s278 = scalar_lea.vmem %s183, %s270
      %279 = vst.msk [vmem:[%s278] sm:$0x1] %vm276, %v275
      %s280 = smul.u32 4, 4
      %s281 = smul.u32 %s280, 1
      %s282 = sshll.u32 %s281, 4
      %283 = dma.done [#allocation5], %s282
      %s284 = smul.u32 %s15, 2
      %s285 = ssub.s32 1, %s284
      loop: start=0, step=1, limit=7
      $region44: #{plan_recognition_forward.3} parent=31 // loop_pre_header
        _
      $region45: #{plan_recognition_forward.3} parent=31 // loop_header
        %s287 = sphi 0, %s291
        %p288 = scmp.ge.s32.totalorder %s287, 7
      $region46: #{plan_recognition_forward.3} parent=31 // loop_header_branch
        %290 = sbr.rel (%p288) target = $region50
      $region47: #{plan_recognition_forward.3} parent=31 // loop_body
        %s292 = sadd.s32 %s287, 1
        %s293 = smul.u32 %s285, %s292
        %s294 = sadd.s32 %s270, %s293
        %s295 = smul.u32 %s294, 2
        %s296 = scalar_lea.vmem [#allocation2], %s295
        %v297 = vld [vmem:[%s296] sm:$0x3]
        %v298 = vld [vmem:[#allocation3] sm:$0x1]
        %v299 = vld [vmem:[#allocation4] sm:$0xf]
        %v300 = vld [vmem:[#allocation4 + $0x4] sm:$0xf]
        %v301 = vld [vmem:[#allocation4 + $0x8] sm:$0xf]
        %v302 = vld [vmem:[#allocation4 + $0xc] sm:$0xf]
        %v307 = vunpack.c.l.b16 %v299
        %v308 = vunpack.c.l.b16 %v300
        %v309 = vunpack.c.l.b16 %v301
        %v310 = vunpack.c.l.b16 %v302
        %v311 = vpack.c.b16 %v308, %v307
        %v312 = vpack.c.b16 %v310, %v309
        %vm315 = vcmask 261120
        %v317 = vsel %vm315, %v298, 0
        %319 = vmatprep.subr.bf16.mxu0 0
        %320 = vmatpush1.bf16.msra.mxu0 0
        %321 = vmatprep.subr.bf16.mxu0 0
        %322 = vmatpush1.bf16.msra.mxu0 0
        %323 = vmatprep.subr.bf16.mxu0 0
        %324 = vmatpush1.bf16.msra.mxu0 0
        %325 = vmatprep.subr.bf16.mxu0 0
        %326 = vmatpush1.bf16.msra.mxu0 0
        %327 = vmatprep.subr.bf16.mxu0 0
        %328 = vmatpush1.bf16.msra.mxu0 0
        %329 = vmatprep.subr.bf16.mxu0 0
        %330 = vmatpush1.bf16.msra.mxu0 0
        %331 = vmatprep.subr.bf16.mxu0 0
        %332 = vmatpush1.bf16.msra.mxu0 %v312
        %333 = vmatprep.subr.bf16.mxu0 0
        %334 = vmatpush1.bf16.msra.mxu0 %v311
        %335 = vmatprep.subr.bf16.mxu0 0
        %336 = vmatpush2.bf16.msra.mxu0 0
        %337 = vmatprep.subr.bf16.mxu0 0
        %338 = vmatpush2.bf16.msra.mxu0 0
        %339 = vmatprep.subr.bf16.mxu0 0
        %340 = vmatpush2.bf16.msra.mxu0 0
        %341 = vmatprep.subr.bf16.mxu0 0
        %342 = vmatpush2.bf16.msra.mxu0 0
        %343 = vmatprep.subr.bf16.mxu0 0
        %344 = vmatpush2.bf16.msra.mxu0 0
        %345 = vmatprep.subr.bf16.mxu0 0
        %346 = vmatpush2.bf16.msra.mxu0 0
        %347 = vmatprep.subr.bf16.mxu0 0
        %348 = vmatpush2.bf16.msra.mxu0 0
        %349 = vmatprep.subr.bf16.mxu0 0
        %350 = vmatpush2.bf16.msra.mxu0 0
        %351 = vmatprep.mubr.bf16.mxu0 0
        %352 = vmatmul.mubr.bf16.gmra.mxu0 %v317
        %v353 = vpop.f32.mrf.mxu0
        %v354 = vadd.f32 0.0, %v353
        %v355 = vpop.f32.mrf.mxu0
        %v356 = vpop.f32.mrf.mxu0
        %v357 = vpop.f32.mrf.mxu0
        %358 = vdwg.mxu0
        %v359 = vadd.f32 %v297, %v354
        %v360 = vmax.f32 %v359, 0.0
        %v361 = vpack.c.bf16 %v360, %v360
        %362 = vst.msk [vmem:[#allocation3] sm:$0x1] %vm276, %v361
        %s363 = scalar_lea.vmem %s183, %s294
        %364 = vst.msk [vmem:[%s363] sm:$0x1] %vm276, %v361
      $region48: #{plan_recognition_forward.3} parent=31 // loop_footer
        %s291 = sadd.s32 1, %s287
      $region49: #{plan_recognition_forward.3} parent=31 // loop_footer_branch
        %286 = sbr.rel target = $region45
      $region50: #{plan_recognition_forward.3} parent=31 // loop_exit
        _
      %p365 = scmp.lt.s32.totalorder %s15, 1
      %s366 = scalar_select %p365, %s15, 1
      %s367 = smul.addr %s366, 8
      %s368 = scalar_lea.vmem %s4, %s367
      // Predicated region
      $region51: #{plan_recognition_forward.3} parent=31 // pred_check
        %p369 = pneg %p106
      $region52: #{plan_recognition_forward.3} parent=31 // pred_check_branch
        %371 = sbr.rel (%p369) target = $region54
      $region53: #{plan_recognition_forward.3} parent=31 // pred_region
        _
      $region54: #{plan_recognition_forward.3} parent=31 // pred_fallthru
        _
    $region32: #{plan_recognition_forward.3} parent=5 // pred_fallthru
      _
    %p372 = scmp.le.s32.totalorder 2, %s10
    // Predicated region
    $region55: #{plan_recognition_forward.3} parent=5 // pred_check
      %p373 = pneg %p372
    $region56: #{plan_recognition_forward.3} parent=5 // pred_check_branch
      %375 = sbr.rel (%p373) target = $region58
    $region57: #{plan_recognition_forward.3} parent=5 // pred_region
      %s376 = ssub.s32 %s10, 2
      // Predicated region
      $region59: #{plan_recognition_forward.3} parent=57 // pred_check
        %p377 = pneg %p112
      $region60: #{plan_recognition_forward.3} parent=57 // pred_check_branch
        %379 = sbr.rel (%p377) target = $region62
      $region61: #{plan_recognition_forward.3} parent=57 // pred_region
        %p380 = scmp.lt.s32.totalorder %s16, 1
        %s381 = scalar_select %p380, %s16, 1
        %s382 = smul.addr %s381, 8
        %s383 = scalar_lea.vmem %s4, %s382
      $region62: #{plan_recognition_forward.3} parent=57 // pred_fallthru
        _
    $region58: #{plan_recognition_forward.3} parent=5 // pred_fallthru
      _
  $region6: #{plan_recognition_forward.3} parent=0 // loop_footer
    %s14 = sadd.s32 1, %s10
  $region7: #{plan_recognition_forward.3} parent=0 // loop_footer_branch
    %9 = sbr.rel target = $region3
  $region8: #{plan_recognition_forward.3} parent=0 // loop_exit
    _
  %384 = vsyncmov [#allocation5]
  %s385 = vpop.sfrf %384
  %p386 = scmp.eq.s32.totalorder %s385, 0
  %p387 = pneg %p386
  %389 = shalt.err (%p387)

// kernel: plan_recognition_forward.4
$region0: #{plan_recognition_forward.4}
  #allocation0 [shape = 'u32[]', space=smem, size = 0x4, offset = 0x4, fixed_abs, tag = 'smem constant byte address 0x4 - core index']
  #allocation1 [shape = 'u32[144,128]{1,0:T(1,128)}', space=vmem, size = 0x12000, scoped, tag = 'internal scratch']
  %s0 = inlined_call_operand.vmem [shape: bf16[2,16,32], index: 0, kind: input, shape index: {}, may-alias: {0,3}]
  %s1 = inlined_call_operand.vmem [shape: bf16[2,32,32], index: 1, kind: input, shape index: {}]
  %s2 = inlined_call_operand.vmem [shape: f32[1,32], index: 2, kind: input, shape index: {}]
  %s3 = inlined_call_operand.vmem [shape: bf16[2,8,2,32], index: 3, kind: input, shape index: {}, may-alias: {0,3}]
  %s4 = inlined_call_operand.vmem [shape: bf16[2,32,32], index: 4, kind: input, shape index: {}]
  %s5 = inlined_call_operand.vmem [shape: f32[1,32], index: 5, kind: input, shape index: {}]
  %s6 = inlined_call_operand.vmem [shape: bf16[16,32], index: 6, kind: output, shape index: {0}]
  %s7 = inlined_call_operand.vmem [shape: bf16[2,32], index: 7, kind: output, shape index: {1}]
  %8 = xla_tuple %s6, %s7
  %s9 = sld [smem:[#allocation0]]
  $region80: #{plan_recognition_forward.4} parent=0
    _
  %s11 = ssub.s32 1, %s9
  %s12 = scalar_select 0, %s11, %s9
  $region1: #{plan_recognition_forward.4} parent=0
    #allocation2 [shape = 'u8[1024]{0}', space=vmem, size = 0x400, scoped, tag = 'input window, operand 3, single buffered']
    // Predicated region
    $region2: #{plan_recognition_forward.4} parent=1 // pred_check
      _
    $region3: #{plan_recognition_forward.4} parent=1 // pred_check_branch
      %14 = sbr.rel (0) target = $region5
    $region4: #{plan_recognition_forward.4} parent=1 // pred_region
      _
    $region5: #{plan_recognition_forward.4} parent=1 // pred_fallthru
      _
    // Predicated region
    $region6: #{plan_recognition_forward.4} parent=1 // pred_check
      _
    $region7: #{plan_recognition_forward.4} parent=1 // pred_check_branch
      %16 = sbr.rel (0) target = $region9
    $region8: #{plan_recognition_forward.4} parent=1 // pred_region
      _
    $region9: #{plan_recognition_forward.4} parent=1 // pred_fallthru
      _
    // Predicated region
    $region10: #{plan_recognition_forward.4} parent=1 // pred_check
      _
    $region11: #{plan_recognition_forward.4} parent=1 // pred_check_branch
      %18 = sbr.rel (0) target = $region13
    $region12: #{plan_recognition_forward.4} parent=1 // pred_region
      _
    $region13: #{plan_recognition_forward.4} parent=1 // pred_fallthru
      _
    // Predicated region
    $region14: #{plan_recognition_forward.4} parent=1 // pred_check
      _
    $region15: #{plan_recognition_forward.4} parent=1 // pred_check_branch
      %20 = sbr.rel (0) target = $region17
    $region16: #{plan_recognition_forward.4} parent=1 // pred_region
      %s21 = scalar_lea.vmem %s3, 7
      // Predicated region
      $region18: #{plan_recognition_forward.4} parent=16 // pred_check
        _
      $region19: #{plan_recognition_forward.4} parent=16 // pred_check_branch
        %23 = sbr.rel (0) target = $region21
      $region20: #{plan_recognition_forward.4} parent=16 // pred_region
        // Predicated region
        $region22: #{plan_recognition_forward.4} parent=20 // pred_check
          _
        $region23: #{plan_recognition_forward.4} parent=20 // pred_check_branch
          %25 = sbr.rel target = $region25
        $region24: #{plan_recognition_forward.4} parent=20 // pred_region
          // Predicated region
          $region37: #{plan_recognition_forward.4} parent=24 // pred_check
            _
          $region38: #{plan_recognition_forward.4} parent=24 // pred_check_branch
            %43 = sbr.rel (0) target = $region40
          $region39: #{plan_recognition_forward.4} parent=24 // pred_region
            %s45 = ssub.s32 2, 1
            loop: start=0, step=1, limit=1
            $region41: #{plan_recognition_forward.4} parent=39 // loop_pre_header
              _
            $region42: #{plan_recognition_forward.4} parent=39 // loop_header
              %s47 = sphi 0, %s51
              %p48 = scmp.ge.s32.totalorder %s47, 1
              %s52 = sphi %s21, %s21
              %s53 = sphi [#allocation2], [#allocation2]
            $region43: #{plan_recognition_forward.4} parent=39 // loop_header_branch
              %50 = sbr.rel (%p48) target = $region47
            $region44: #{plan_recognition_forward.4} parent=39 // loop_body
              %v54 = vld [vmem:[%s52] sm:%s45]
              %55 = vst [vmem:[%s53] sm:%s45] %v54
              %v56 = vld [vmem:[%s52 + $0x8] sm:%s45]
              %57 = vst [vmem:[%s53 + $0x1] sm:%s45] %v56
            $region45: #{plan_recognition_forward.4} parent=39 // loop_footer
              %s51 = sadd.s32 1, %s47
            $region46: #{plan_recognition_forward.4} parent=39 // loop_footer_branch
              %46 = sbr.rel target = $region42
            $region47: #{plan_recognition_forward.4} parent=39 // loop_exit
              _
          $region40: #{plan_recognition_forward.4} parent=24 // pred_fallthru
            _
        $region25: #{plan_recognition_forward.4} parent=20 // pred_fallthru
          _
        // Predicated region
        $region26: #{plan_recognition_forward.4} parent=20 // pred_check
          _
        $region27: #{plan_recognition_forward.4} parent=20 // pred_check_branch
          %27 = sbr.rel (0) target = $region29
        $region28: #{plan_recognition_forward.4} parent=20 // pred_region
          %s29 = ssub.s32 2, 1
          loop: start=0, step=1, limit=1
          $region30: #{plan_recognition_forward.4} parent=28 // loop_pre_header
            _
          $region31: #{plan_recognition_forward.4} parent=28 // loop_header
            %s31 = sphi 0, %s35
            %p32 = scmp.ge.s32.totalorder %s31, 1
            %s36 = sphi %s21, %s21
            %s37 = sphi [#allocation2], [#allocation2]
          $region32: #{plan_recognition_forward.4} parent=28 // loop_header_branch
            %34 = sbr.rel (%p32) target = $region36
          $region33: #{plan_recognition_forward.4} parent=28 // loop_body
            %v38 = vld [vmem:[%s36] sm:%s29]
            %39 = vst [vmem:[%s37] sm:%s29] %v38
            %v40 = vld [vmem:[%s36 + $0x8] sm:%s29]
            %41 = vst [vmem:[%s37 + $0x1] sm:%s29] %v40
          $region34: #{plan_recognition_forward.4} parent=28 // loop_footer
            %s35 = sadd.s32 1, %s31
          $region35: #{plan_recognition_forward.4} parent=28 // loop_footer_branch
            %30 = sbr.rel target = $region31
          $region36: #{plan_recognition_forward.4} parent=28 // loop_exit
            _
        $region29: #{plan_recognition_forward.4} parent=20 // pred_fallthru
          _
      $region21: #{plan_recognition_forward.4} parent=16 // pred_fallthru
        _
      %58 = vnop
    $region17: #{plan_recognition_forward.4} parent=1 // pred_fallthru
      _
    // Predicated region
    $region48: #{plan_recognition_forward.4} parent=1 // pred_check
      _
    $region49: #{plan_recognition_forward.4} parent=1 // pred_check_branch
      %60 = sbr.rel (0) target = $region51
    $region50: #{plan_recognition_forward.4} parent=1 // pred_region
      _
    $region51: #{plan_recognition_forward.4} parent=1 // pred_fallthru
      _
    // Predicated region
    $region52: #{plan_recognition_forward.4} parent=1 // pred_check
      _
    $region53: #{plan_recognition_forward.4} parent=1 // pred_check_branch
      %62 = sbr.rel (0) target = $region55
    $region54: #{plan_recognition_forward.4} parent=1 // pred_region
      _
    $region55: #{plan_recognition_forward.4} parent=1 // pred_fallthru
      _
    // Predicated region
    $region56: #{plan_recognition_forward.4} parent=1 // pred_check
      _
    $region57: #{plan_recognition_forward.4} parent=1 // pred_check_branch
      %64 = sbr.rel (0) target = $region59
    $region58: #{plan_recognition_forward.4} parent=1 // pred_region
      _
    $region59: #{plan_recognition_forward.4} parent=1 // pred_fallthru
      _
    %v66 = vld [vmem:[%s0] sm:$0xf]
    %v67 = vld [vmem:[%s0 + $0x4] sm:$0xf]
    %v68 = vld [vmem:[%s1] sm:$0xf]
    %v69 = vld [vmem:[%s1 + $0x4] sm:$0xf]
    %v70 = vld [vmem:[%s1 + $0x8] sm:$0xf]
    %v71 = vld [vmem:[%s1 + $0xc] sm:$0xf]
    %s72 = scalar_lea.vmem %s0, 8
    %v73 = vld [vmem:[%s72] sm:$0xf]
    %v74 = vld [vmem:[%s72 + $0x4] sm:$0xf]
    %s75 = scalar_lea.vmem %s1, 16
    %v76 = vld [vmem:[%s75] sm:$0xf]
    %v77 = vld [vmem:[%s75 + $0x4] sm:$0xf]
    %v78 = vld [vmem:[%s75 + $0x8] sm:$0xf]
    %v79 = vld [vmem:[%s75 + $0xc] sm:$0xf]
    %v82 = vunpack.c.l.b16 %v73
    %v83 = vunpack.c.l.b16 %v74
    %v84 = vpack.c.b16 %v83, %v82
    %v89 = vunpack.c.l.b16 %v76
    %v90 = vunpack.c.l.b16 %v77
    %v91 = vunpack.c.l.b16 %v78
    %v92 = vunpack.c.l.b16 %v79
    %v93 = vpack.c.b16 %v90, %v89
    %v94 = vpack.c.b16 %v92, %v91
    %vm97 = vcmask 261120
    %v99 = vsel %vm97, %v84, 0
    %101 = vmatprep.subr.bf16.mxu0 0
    %102 = vmatpush1.bf16.msra.mxu0 0
    %103 = vmatprep.subr.bf16.mxu0 0
    %104 = vmatpush1.bf16.msra.mxu0 0
    %105 = vmatprep.subr.bf16.mxu0 0
    %106 = vmatpush1.bf16.msra.mxu0 0
    %107 = vmatprep.subr.bf16.mxu0 0
    %108 = vmatpush1.bf16.msra.mxu0 0
    %109 = vmatprep.subr.bf16.mxu0 0
    %110 = vmatpush1.bf16.msra.mxu0 0
    %111 = vmatprep.subr.bf16.mxu0 0
    %112 = vmatpush1.bf16.msra.mxu0 0
    %113 = vmatprep.subr.bf16.mxu0 0
    %114 = vmatpush1.bf16.msra.mxu0 %v94
    %115 = vmatprep.subr.bf16.mxu0 0
    %116 = vmatpush1.bf16.msra.mxu0 %v93
    %117 = vmatprep.subr.bf16.mxu0 0
    %118 = vmatpush2.bf16.msra.mxu0 0
    %119 = vmatprep.subr.bf16.mxu0 0
    %120 = vmatpush2.bf16.msra.mxu0 0
    %121 = vmatprep.subr.bf16.mxu0 0
    %122 = vmatpush2.bf16.msra.mxu0 0
    %123 = vmatprep.subr.bf16.mxu0 0
    %124 = vmatpush2.bf16.msra.mxu0 0
    %125 = vmatprep.subr.bf16.mxu0 0
    %126 = vmatpush2.bf16.msra.mxu0 0
    %127 = vmatprep.subr.bf16.mxu0 0
    %128 = vmatpush2.bf16.msra.mxu0 0
    %129 = vmatprep.subr.bf16.mxu0 0
    %130 = vmatpush2.bf16.msra.mxu0 0
    %131 = vmatprep.subr.bf16.mxu0 0
    %132 = vmatpush2.bf16.msra.mxu0 0
    %133 = vmatprep.mubr.bf16.mxu0 0
    %134 = vmatmul.mubr.bf16.gmra.mxu0 %v99
    %v135 = vpop.f32.mrf.mxu0
    %v136 = vadd.f32 0.0, %v135
    %v137 = vpop.f32.mrf.mxu0
    %v138 = vpop.f32.mrf.mxu0
    %v139 = vadd.f32 0.0, %v138
    %v140 = vpop.f32.mrf.mxu0
    %141 = vdwg.mxu0
    %v144 = vunpack.c.l.b16 %v66
    %v145 = vunpack.c.l.b16 %v67
    %v146 = vpack.c.b16 %v145, %v144
    %v151 = vunpack.c.l.b16 %v68
    %v152 = vunpack.c.l.b16 %v69
    %v153 = vunpack.c.l.b16 %v70
    %v154 = vunpack.c.l.b16 %v71
    %v155 = vpack.c.b16 %v152, %v151
    %v156 = vpack.c.b16 %v154, %v153
    %v160 = vsel %vm97, %v146, 0
    %162 = vmatprep.subr.bf16.mxu0 0
    %163 = vmatpush1.bf16.msra.mxu0 0
    %164 = vmatprep.subr.bf16.mxu0 0
    %165 = vmatpush1.bf16.msra.mxu0 0
    %166 = vmatprep.subr.bf16.mxu0 0
    %167 = vmatpush1.bf16.msra.mxu0 0
    %168 = vmatprep.subr.bf16.mxu0 0
    %169 = vmatpush1.bf16.msra.mxu0 0
    %170 = vmatprep.subr.bf16.mxu0 0
    %171 = vmatpush1.bf16.msra.mxu0 0
    %172 = vmatprep.subr.bf16.mxu0 0
    %173 = vmatpush1.bf16.msra.mxu0 0
    %174 = vmatprep.subr.bf16.mxu0 0
    %175 = vmatpush1.bf16.msra.mxu0 %v156
    %176 = vmatprep.subr.bf16.mxu0 0
    %177 = vmatpush1.bf16.msra.mxu0 %v155
    %178 = vmatprep.subr.bf16.mxu0 0
    %179 = vmatpush2.bf16.msra.mxu0 0
    %180 = vmatprep.subr.bf16.mxu0 0
    %181 = vmatpush2.bf16.msra.mxu0 0
    %182 = vmatprep.subr.bf16.mxu0 0
    %183 = vmatpush2.bf16.msra.mxu0 0
    %184 = vmatprep.subr.bf16.mxu0 0
    %185 = vmatpush2.bf16.msra.mxu0 0
    %186 = vmatprep.subr.bf16.mxu0 0
    %187 = vmatpush2.bf16.msra.mxu0 0
    %188 = vmatprep.subr.bf16.mxu0 0
    %189 = vmatpush2.bf16.msra.mxu0 0
    %190 = vmatprep.subr.bf16.mxu0 0
    %191 = vmatpush2.bf16.msra.mxu0 0
    %192 = vmatprep.subr.bf16.mxu0 0
    %193 = vmatpush2.bf16.msra.mxu0 0
    %194 = vmatprep.mubr.bf16.mxu0 0
    %195 = vmatmul.mubr.bf16.gmra.mxu0 %v160
    %v196 = vpop.f32.mrf.mxu0
    %v197 = vadd.f32 %v136, %v196
    %v198 = vpop.f32.mrf.mxu0
    %v199 = vpop.f32.mrf.mxu0
    %v200 = vadd.f32 %v139, %v199
    %v201 = vpop.f32.mrf.mxu0
    %202 = vdwg.mxu0
    %v203 = vld [vmem:[%s2] sm:$0x1]
    %v205 = vlaneseq
    %v206 = vshrl.u32 %v205, 7
    %v207 = vsub.s32 0, %v206
    %v208 = vrot.slane %v203, %v207
    %v210 = vadd.f32 %v197, %v208
    %v211 = vadd.f32 %v200, %v208
    %v212 = vpack.c.bf16 %v211, %v210
    %v214 = vunpack.c.l.b16 %v212
    %v215 = vunpack.c.h.b16 %v212
    %v216 = vpack.c.b16 %v214, %v214
    %v217 = vpack.c.b16 %v215, %v215
    %vm220 = vcmask 257024
    %221 = vst.msk [vmem:[%s6] sm:$0xf] %vm220, %v216
    %222 = vst.msk [vmem:[%s6 + $0x4] sm:$0xf] %vm220, %v217
    %p223 = scmp.eq.s32.totalorder 0, 0
    // Predicated region
    $region60: #{plan_recognition_forward.4} parent=1 // pred_check
      %p224 = pneg %p223
    $region61: #{plan_recognition_forward.4} parent=1 // pred_check_branch
      %226 = sbr.rel (%p224) target = $region63
    $region62: #{plan_recognition_forward.4} parent=1 // pred_region
      %v227 = vld [vmem:[#allocation2] sm:$0x1]
      %v228 = vld [vmem:[%s4] sm:$0xf]
      %v229 = vld [vmem:[%s4 + $0x4] sm:$0xf]
      %v230 = vld [vmem:[%s4 + $0x8] sm:$0xf]
      %v231 = vld [vmem:[%s4 + $0xc] sm:$0xf]
      %s232 = scalar_lea.vmem [#allocation2], 1
      %v233 = vld [vmem:[%s232] sm:$0x1]
      %s234 = scalar_lea.vmem %s4, 16
      %v235 = vld [vmem:[%s234] sm:$0xf]
      %v236 = vld [vmem:[%s234 + $0x4] sm:$0xf]
      %v237 = vld [vmem:[%s234 + $0x8] sm:$0xf]
      %v238 = vld [vmem:[%s234 + $0xc] sm:$0xf]
      %v243 = vunpack.c.l.b16 %v235
      %v244 = vunpack.c.l.b16 %v236
      %v245 = vunpack.c.l.b16 %v237
      %v246 = vunpack.c.l.b16 %v238
      %v247 = vpack.c.b16 %v244, %v243
      %v248 = vpack.c.b16 %v246, %v245
      %v252 = vsel %vm97, %v233, 0
      %254 = vmatprep.subr.bf16.mxu0 0
      %255 = vmatpush1.bf16.msra.mxu0 0
      %256 = vmatprep.subr.bf16.mxu0 0
      %257 = vmatpush1.bf16.msra.mxu0 0
      %258 = vmatprep.subr.bf16.mxu0 0
      %259 = vmatpush1.bf16.msra.mxu0 0
      %260 = vmatprep.subr.bf16.mxu0 0
      %261 = vmatpush1.bf16.msra.mxu0 0
      %262 = vmatprep.subr.bf16.mxu0 0
      %263 = vmatpush1.bf16.msra.mxu0 0
      %264 = vmatprep.subr.bf16.mxu0 0
      %265 = vmatpush1.bf16.msra.mxu0 0
      %266 = vmatprep.subr.bf16.mxu0 0
      %267 = vmatpush1.bf16.msra.mxu0 %v248
      %268 = vmatprep.subr.bf16.mxu0 0
      %269 = vmatpush1.bf16.msra.mxu0 %v247
      %270 = vmatprep.subr.bf16.mxu0 0
      %271 = vmatpush2.bf16.msra.mxu0 0
      %272 = vmatprep.subr.bf16.mxu0 0
      %273 = vmatpush2.bf16.msra.mxu0 0
      %274 = vmatprep.subr.bf16.mxu0 0
      %275 = vmatpush2.bf16.msra.mxu0 0
      %276 = vmatprep.subr.bf16.mxu0 0
      %277 = vmatpush2.bf16.msra.mxu0 0
      %278 = vmatprep.subr.bf16.mxu0 0
      %279 = vmatpush2.bf16.msra.mxu0 0
      %280 = vmatprep.subr.bf16.mxu0 0
      %281 = vmatpush2.bf16.msra.mxu0 0
      %282 = vmatprep.subr.bf16.mxu0 0
      %283 = vmatpush2.bf16.msra.mxu0 0
      %284 = vmatprep.subr.bf16.mxu0 0
      %285 = vmatpush2.bf16.msra.mxu0 0
      %286 = vmatprep.mubr.bf16.mxu0 0
      %287 = vmatmul.mubr.bf16.gmra.mxu0 %v252
      %v288 = vpop.f32.mrf.mxu0
      %v289 = vadd.f32 0.0, %v288
      %v290 = vpop.f32.mrf.mxu0
      %v291 = vpop.f32.mrf.mxu0
      %v292 = vpop.f32.mrf.mxu0
      %293 = vdwg.mxu0
      %v298 = vunpack.c.l.b16 %v228
      %v299 = vunpack.c.l.b16 %v229
      %v300 = vunpack.c.l.b16 %v230
      %v301 = vunpack.c.l.b16 %v231
      %v302 = vpack.c.b16 %v299, %v298
      %v303 = vpack.c.b16 %v301, %v300
      %v307 = vsel %vm97, %v227, 0
      %309 = vmatprep.subr.bf16.mxu0 0
      %310 = vmatpush1.bf16.msra.mxu0 0
      %311 = vmatprep.subr.bf16.mxu0 0
      %312 = vmatpush1.bf16.msra.mxu0 0
      %313 = vmatprep.subr.bf16.mxu0 0
      %314 = vmatpush1.bf16.msra.mxu0 0
      %315 = vmatprep.subr.bf16.mxu0 0
      %316 = vmatpush1.bf16.msra.mxu0 0
      %317 = vmatprep.subr.bf16.mxu0 0
      %318 = vmatpush1.bf16.msra.mxu0 0
      %319 = vmatprep.subr.bf16.mxu0 0
      %320 = vmatpush1.bf16.msra.mxu0 0
      %321 = vmatprep.subr.bf16.mxu0 0
      %322 = vmatpush1.bf16.msra.mxu0 %v303
      %323 = vmatprep.subr.bf16.mxu0 0
      %324 = vmatpush1.bf16.msra.mxu0 %v302
      %325 = vmatprep.subr.bf16.mxu0 0
      %326 = vmatpush2.bf16.msra.mxu0 0
      %327 = vmatprep.subr.bf16.mxu0 0
      %328 = vmatpush2.bf16.msra.mxu0 0
      %329 = vmatprep.subr.bf16.mxu0 0
      %330 = vmatpush2.bf16.msra.mxu0 0
      %331 = vmatprep.subr.bf16.mxu0 0
      %332 = vmatpush2.bf16.msra.mxu0 0
      %333 = vmatprep.subr.bf16.mxu0 0
      %334 = vmatpush2.bf16.msra.mxu0 0
      %335 = vmatprep.subr.bf16.mxu0 0
      %336 = vmatpush2.bf16.msra.mxu0 0
      %337 = vmatprep.subr.bf16.mxu0 0
      %338 = vmatpush2.bf16.msra.mxu0 0
      %339 = vmatprep.subr.bf16.mxu0 0
      %340 = vmatpush2.bf16.msra.mxu0 0
      %341 = vmatprep.mubr.bf16.mxu0 0
      %342 = vmatmul.mubr.bf16.gmra.mxu0 %v307
      %v343 = vpop.f32.mrf.mxu0
      %v344 = vadd.f32 %v289, %v343
      %v345 = vpop.f32.mrf.mxu0
      %v346 = vpop.f32.mrf.mxu0
      %v347 = vpop.f32.mrf.mxu0
      %348 = vdwg.mxu0
      %v349 = vld [vmem:[%s5] sm:$0x1]
      %v351 = vlaneseq
      %v352 = vshrl.u32 %v351, 7
      %v353 = vsub.s32 0, %v352
      %v354 = vrot.slane %v349, %v353
      %v356 = vadd.f32 %v344, %v354
      %v357 = vmax.f32 %v356, 0.0
      %v358 = vpack.c.bf16 %v357, %v357
      %vm359 = vcmask 253952
      %360 = vst.msk [vmem:[%s7] sm:$0x1] %vm359, %v358
    $region63: #{plan_recognition_forward.4} parent=1 // pred_fallthru
      _
    // Predicated region
    $region64: #{plan_recognition_forward.4} parent=1 // pred_check
      _
    $region65: #{plan_recognition_forward.4} parent=1 // pred_check_branch
      %362 = sbr.rel (0) target = $region67
    $region66: #{plan_recognition_forward.4} parent=1 // pred_region
      _
    $region67: #{plan_recognition_forward.4} parent=1 // pred_fallthru
      _
    // Predicated region
    $region68: #{plan_recognition_forward.4} parent=1 // pred_check
      _
    $region69: #{plan_recognition_forward.4} parent=1 // pred_check_branch
      %364 = sbr.rel (0) target = $region71
    $region70: #{plan_recognition_forward.4} parent=1 // pred_region
      _
    $region71: #{plan_recognition_forward.4} parent=1 // pred_fallthru
      _
    // Predicated region
    $region72: #{plan_recognition_forward.4} parent=1 // pred_check
      _
    $region73: #{plan_recognition_forward.4} parent=1 // pred_check_branch
      %366 = sbr.rel (0) target = $region75
    $region74: #{plan_recognition_forward.4} parent=1 // pred_region
      _
    $region75: #{plan_recognition_forward.4} parent=1 // pred_fallthru
      _
    // Predicated region
    $region76: #{plan_recognition_forward.4} parent=1 // pred_check
      _
    $region77: #{plan_recognition_forward.4} parent=1 // pred_check_branch
      %368 = sbr.rel (0) target = $region79
    $region78: #{plan_recognition_forward.4} parent=1 // pred_region
      _
    $region79: #{plan_recognition_forward.4} parent=1 // pred_fallthru
      _

// kernel: plan_recognition_forward.5
$region0: #{plan_recognition_forward.5}
  #allocation0 [shape = 'u32[]', space=smem, size = 0x4, offset = 0x4, fixed_abs, tag = 'smem constant byte address 0x4 - core index']
  #allocation1 [shape = 'u32[144,128]{1,0:T(1,128)}', space=vmem, size = 0x12000, scoped, tag = 'internal scratch']
  #allocation2 [shape = 'bf16[2,32]{1,0:T(2,128)(2,1)}', space=vmem, size = 0x200, scoped, tag = 'scratch operand']
  #allocation3 [shape = 'bf16[32,32]{1,0:T(8,128)(2,1)}', space=vmem, size = 0x2000, scoped, tag = 'scratch operand']
  #allocation4 [shape = 's32[1]{0}', space=sflag, size = 0x4, scoped, tag = 'scratch operand']
  #allocation9 [shape = 's32[]', space=sflag, size = 0x4, offset = 0, fixed_abs, tag = 'sflag constant byte address 0x0 - dummy sync flag']
  %s0 = inlined_call_operand.vmem [shape: bf16[8,2,32], index: 0, kind: input, shape index: {}]
  %s1 = inlined_call_operand.vmem [shape: bf16[32,32], index: 1, kind: input, shape index: {}]
  %s2 = inlined_call_operand.vmem [shape: bf16[2,32], index: 2, kind: input, shape index: {}]
  %s3 = inlined_call_operand.vmem [shape: bf16[2,32,16], index: 3, kind: input, shape index: {}]
  %s4 = inlined_call_operand.vmem [shape: f32[1,16], index: 4, kind: input, shape index: {}]
  %s5 = inlined_call_operand.hbm [shape: f32[2,8], index: 5, kind: output, shape index: {0}]
  %s6 = inlined_call_operand.hbm [shape: f32[2,8], index: 6, kind: output, shape index: {1}]
  %7 = xla_tuple %s5, %s6
  %s8 = sld [smem:[#allocation0]]
  $region75: #{plan_recognition_forward.5} parent=0
    _
  %s10 = ssub.s32 1, %s8
  %s11 = scalar_select 0, %s10, %s8
  $region1: #{plan_recognition_forward.5} parent=0
    #allocation5 [shape = 'u8[1024]{0}', space=vmem, size = 0x400, scoped, tag = 'output window, operand 0, single buffered']
    #allocation6 [shape = 's32[1]{0}', space=sflag, size = 0x4, scoped, tag = 'scoped memory for plan_recognition_forward.5']
    #allocation7 [shape = 'u8[1024]{0}', space=vmem, size = 0x400, scoped, tag = 'output window, operand 1, single buffered']
    #allocation8 [shape = 's32[1]{0}', space=sflag, size = 0x4, scoped, tag = 'scoped memory for plan_recognition_forward.5']
    %12 = vsyncpa [#allocation6], 0
    %13 = vsyncpa [#allocation8], 0
    // Predicated region
    $region2: #{plan_recognition_forward.5} parent=1 // pred_check
      _
    $region3: #{plan_recognition_forward.5} parent=1 // pred_check_branch
      %15 = sbr.rel (0) target = $region5
    $region4: #{plan_recognition_forward.5} parent=1 // pred_region
      _
    $region5: #{plan_recognition_forward.5} parent=1 // pred_fallthru
      _
    // Predicated region
    $region6: #{plan_recognition_forward.5} parent=1 // pred_check
      _
    $region7: #{plan_recognition_forward.5} parent=1 // pred_check_branch
      %17 = sbr.rel (0) target = $region9
    $region8: #{plan_recognition_forward.5} parent=1 // pred_region
      _
    $region9: #{plan_recognition_forward.5} parent=1 // pred_fallthru
      _
    // Predicated region
    $region10: #{plan_recognition_forward.5} parent=1 // pred_check
      _
    $region11: #{plan_recognition_forward.5} parent=1 // pred_check_branch
      %19 = sbr.rel (0) target = $region13
    $region12: #{plan_recognition_forward.5} parent=1 // pred_region
      _
    $region13: #{plan_recognition_forward.5} parent=1 // pred_fallthru
      _
    // Predicated region
    $region14: #{plan_recognition_forward.5} parent=1 // pred_check
      _
    $region15: #{plan_recognition_forward.5} parent=1 // pred_check_branch
      %21 = sbr.rel (0) target = $region17
    $region16: #{plan_recognition_forward.5} parent=1 // pred_region
      _
    $region17: #{plan_recognition_forward.5} parent=1 // pred_fallthru
      _
    %p24 = scmp.lt.u32.totalorder 16, 8
    %p25 = pneg %p24
    // Predicated region
    $region18: #{plan_recognition_forward.5} parent=1 // pred_check
      _
    $region19: #{plan_recognition_forward.5} parent=1 // pred_check_branch
      %27 = sbr.rel (%p24) target = $region21
    $region20: #{plan_recognition_forward.5} parent=1 // pred_region
      %s43 = sand.u32 16, 7
      %p44 = scmp.eq.s32.totalorder %s43, 0
      // Predicated region
      $region33: #{plan_recognition_forward.5} parent=20 // pred_check
        %p45 = pneg %p44
      $region34: #{plan_recognition_forward.5} parent=20 // pred_check_branch
        %47 = sbr.rel (%p45) target = $region36
      $region35: #{plan_recognition_forward.5} parent=20 // pred_region
        loop: start=0, step=1, limit=1
        $region37: #{plan_recognition_forward.5} parent=35 // loop_pre_header
          _
        $region38: #{plan_recognition_forward.5} parent=35 // loop_header
          %s49 = sphi 0, %s53
          %p50 = scmp.ge.s32.totalorder %s49, 1
          %s54 = sphi %s1, %s1
          %s55 = sphi [#allocation3], [#allocation3]
        $region39: #{plan_recognition_forward.5} parent=35 // loop_header_branch
          %52 = sbr.rel (%p50) target = $region43
        $region40: #{plan_recognition_forward.5} parent=35 // loop_body
          %v56 = vld [vmem:[%s54] sm:$0xff]
          %57 = vst [vmem:[%s55] sm:$0xff] %v56
          %v58 = vld [vmem:[%s54 + $0x8] sm:$0xff]
          %59 = vst [vmem:[%s55 + $0x8] sm:$0xff] %v58
        $region41: #{plan_recognition_forward.5} parent=35 // loop_footer
          %s53 = sadd.s32 1, %s49
        $region42: #{plan_recognition_forward.5} parent=35 // loop_footer_branch
          %48 = sbr.rel target = $region38
        $region43: #{plan_recognition_forward.5} parent=35 // loop_exit
          _
      $region36: #{plan_recognition_forward.5} parent=20 // pred_fallthru
        _
      %p60 = pneg %p44
      // Predicated region
      $region44: #{plan_recognition_forward.5} parent=20 // pred_check
        _
      $region45: #{plan_recognition_forward.5} parent=20 // pred_check_branch
        %62 = sbr.rel (%p44) target = $region47
      $region46: #{plan_recognition_forward.5} parent=20 // pred_region
        %s63 = sand.u32 16, 7
      $region47: #{plan_recognition_forward.5} parent=20 // pred_fallthru
        _
    $region21: #{plan_recognition_forward.5} parent=1 // pred_fallthru
      _
    // Predicated region
    $region22: #{plan_recognition_forward.5} parent=1 // pred_check
      %p28 = pneg %p24
    $region23: #{plan_recognition_forward.5} parent=1 // pred_check_branch
      %30 = sbr.rel (%p28) target = $region25
    $region24: #{plan_recognition_forward.5} parent=1 // pred_region
      %s31 = sshll.u32 1, 16
      %s32 = ssub.s32 %s31, 1
      loop: start=0, step=1, limit=1
      $region26: #{plan_recognition_forward.5} parent=24 // loop_pre_header
        _
      $region27: #{plan_recognition_forward.5} parent=24 // loop_header
        %s34 = sphi 0, %s38
        %p35 = scmp.ge.s32.totalorder %s34, 1
        %s39 = sphi %s1, %s1
        %s40 = sphi [#allocation3], [#allocation3]
      $region28: #{plan_recognition_forward.5} parent=24 // loop_header_branch
        %37 = sbr.rel (%p35) target = $region32
      $region29: #{plan_recognition_forward.5} parent=24 // loop_body
        %v41 = vld [vmem:[%s39] sm:%s32]
        %42 = vst [vmem:[%s40] sm:%s32] %v41
      $region30: #{plan_recognition_forward.5} parent=24 // loop_footer
        %s38 = sadd.s32 1, %s34
      $region31: #{plan_recognition_forward.5} parent=24 // loop_footer_branch
        %33 = sbr.rel target = $region27
      $region32: #{plan_recognition_forward.5} parent=24 // loop_exit
        _
    $region25: #{plan_recognition_forward.5} parent=1 // pred_fallthru
      _
    // Predicated region
    $region48: #{plan_recognition_forward.5} parent=1 // pred_check
      _
    $region49: #{plan_recognition_forward.5} parent=1 // pred_check_branch
      %66 = sbr.rel (0) target = $region51
    $region50: #{plan_recognition_forward.5} parent=1 // pred_region
      %67 = vsyncadd [#allocation4], 256
    $region51: #{plan_recognition_forward.5} parent=1 // pred_fallthru
      _
    %v68 = vld [vmem:[%s0] sm:$0x1]
    %v69 = vunpack.c.l.bf16 %v68
    %v70 = vmax.f32 %v69, 0.0
    %v71 = vpack.c.bf16 %v70, %v70
    %vm72 = vcmask 253952
    %73 = vst.msk [vmem:[#allocation2] sm:$0x1] %vm72, %v71
    %s74 = smul.u32 4, 4
    %s75 = smul.u32 %s74, 1
    %s76 = sshll.u32 %s75, 4
    %77 = dma.done [#allocation4], %s76
    loop: start=0, step=1, limit=7
    $region52: #{plan_recognition_forward.5} parent=1 // loop_pre_header
      _
    $region53: #{plan_recognition_forward.5} parent=1 // loop_header
      %s79 = sphi 0, %s83
      %p80 = scmp.ge.s32.totalorder %s79, 7
    $region54: #{plan_recognition_forward.5} parent=1 // loop_header_branch
      %82 = sbr.rel (%p80) target = $region58
    $region55: #{plan_recognition_forward.5} parent=1 // loop_body
      %s84 = sadd.s32 %s79, 1
      %s85 = scalar_lea.vmem %s0, %s84
      %v86 = vld [vmem:[%s85] sm:$0x1]
      %v87 = vunpack.c.l.bf16 %v86
      %v88 = vld [vmem:[#allocation2] sm:$0x1]
      %v89 = vld [vmem:[#allocation3] sm:$0xf]
      %v90 = vld [vmem:[#allocation3 + $0x4] sm:$0xf]
      %v91 = vld [vmem:[#allocation3 + $0x8] sm:$0xf]
      %v92 = vld [vmem:[#allocation3 + $0xc] sm:$0xf]
      %v97 = vunpack.c.l.b16 %v89
      %v98 = vunpack.c.l.b16 %v90
      %v99 = vunpack.c.l.b16 %v91
      %v100 = vunpack.c.l.b16 %v92
      %v101 = vpack.c.b16 %v98, %v97
      %v102 = vpack.c.b16 %v100, %v99
      %vm105 = vcmask 261120
      %v107 = vsel %vm105, %v88, 0
      %109 = vmatprep.subr.bf16.mxu0 0
      %110 = vmatpush1.bf16.msra.mxu0 0
      %111 = vmatprep.subr.bf16.mxu0 0
      %112 = vmatpush1.bf16.msra.mxu0 0
      %113 = vmatprep.subr.bf16.mxu0 0
      %114 = vmatpush1.bf16.msra.mxu0 0
      %115 = vmatprep.subr.bf16.mxu0 0
      %116 = vmatpush1.bf16.msra.mxu0 0
      %117 = vmatprep.subr.bf16.mxu0 0
      %118 = vmatpush1.bf16.msra.mxu0 0
      %119 = vmatprep.subr.bf16.mxu0 0
      %120 = vmatpush1.bf16.msra.mxu0 0
      %121 = vmatprep.subr.bf16.mxu0 0
      %122 = vmatpush1.bf16.msra.mxu0 %v102
      %123 = vmatprep.subr.bf16.mxu0 0
      %124 = vmatpush1.bf16.msra.mxu0 %v101
      %125 = vmatprep.subr.bf16.mxu0 0
      %126 = vmatpush2.bf16.msra.mxu0 0
      %127 = vmatprep.subr.bf16.mxu0 0
      %128 = vmatpush2.bf16.msra.mxu0 0
      %129 = vmatprep.subr.bf16.mxu0 0
      %130 = vmatpush2.bf16.msra.mxu0 0
      %131 = vmatprep.subr.bf16.mxu0 0
      %132 = vmatpush2.bf16.msra.mxu0 0
      %133 = vmatprep.subr.bf16.mxu0 0
      %134 = vmatpush2.bf16.msra.mxu0 0
      %135 = vmatprep.subr.bf16.mxu0 0
      %136 = vmatpush2.bf16.msra.mxu0 0
      %137 = vmatprep.subr.bf16.mxu0 0
      %138 = vmatpush2.bf16.msra.mxu0 0
      %139 = vmatprep.subr.bf16.mxu0 0
      %140 = vmatpush2.bf16.msra.mxu0 0
      %141 = vmatprep.mubr.bf16.mxu0 0
      %142 = vmatmul.mubr.bf16.gmra.mxu0 %v107
      %v143 = vpop.f32.mrf.mxu0
      %v144 = vadd.f32 0.0, %v143
      %v145 = vpop.f32.mrf.mxu0
      %v146 = vpop.f32.mrf.mxu0
      %v147 = vpop.f32.mrf.mxu0
      %148 = vdwg.mxu0
      %v149 = vadd.f32 %v87, %v144
      %v150 = vmax.f32 %v149, 0.0
      %v151 = vpack.c.bf16 %v150, %v150
      %152 = vst.msk [vmem:[#allocation2] sm:$0x1] %vm72, %v151
    $region56: #{plan_recognition_forward.5} parent=1 // loop_footer
      %s83 = sadd.s32 1, %s79
    $region57: #{plan_recognition_forward.5} parent=1 // loop_footer_branch
      %78 = sbr.rel target = $region53
    $region58: #{plan_recognition_forward.5} parent=1 // loop_exit
      _
    %v153 = vld [vmem:[#allocation2] sm:$0x1]
    %v154 = vld [vmem:[%s3] sm:$0xf]
    %v155 = vld [vmem:[%s3 + $0x4] sm:$0xf]
    %v156 = vld [vmem:[%s3 + $0x8] sm:$0xf]
    %v157 = vld [vmem:[%s3 + $0xc] sm:$0xf]
    %v158 = vld [vmem:[%s2] sm:$0x1]
    %s159 = scalar_lea.vmem %s3, 16
    %v160 = vld [vmem:[%s159] sm:$0xf]
    %v161 = vld [vmem:[%s159 + $0x4] sm:$0xf]
    %v162 = vld [vmem:[%s159 + $0x8] sm:$0xf]
    %v163 = vld [vmem:[%s159 + $0xc] sm:$0xf]
    %v168 = vunpack.c.l.b16 %v160
    %v169 = vunpack.c.l.b16 %v161
    %v170 = vunpack.c.l.b16 %v162
    %v171 = vunpack.c.l.b16 %v163
    %v172 = vpack.c.b16 %v169, %v168
    %v173 = vpack.c.b16 %v171, %v170
    %vm176 = vcmask 261120
    %v178 = vsel %vm176, %v158, 0
    %180 = vmatprep.subr.bf16.mxu0 0
    %181 = vmatpush1.bf16.msra.mxu0 0
    %182 = vmatprep.subr.bf16.mxu0 0
    %183 = vmatpush1.bf16.msra.mxu0 0
    %184 = vmatprep.subr.bf16.mxu0 0
    %185 = vmatpush1.bf16.msra.mxu0 0
    %186 = vmatprep.subr.bf16.mxu0 0
    %187 = vmatpush1.bf16.msra.mxu0 0
    %188 = vmatprep.subr.bf16.mxu0 0
    %189 = vmatpush1.bf16.msra.mxu0 0
    %190 = vmatprep.subr.bf16.mxu0 0
    %191 = vmatpush1.bf16.msra.mxu0 0
    %192 = vmatprep.subr.bf16.mxu0 0
    %193 = vmatpush1.bf16.msra.mxu0 %v173
    %194 = vmatprep.subr.bf16.mxu0 0
    %195 = vmatpush1.bf16.msra.mxu0 %v172
    %196 = vmatprep.subr.bf16.mxu0 0
    %197 = vmatpush2.bf16.msra.mxu0 0
    %198 = vmatprep.subr.bf16.mxu0 0
    %199 = vmatpush2.bf16.msra.mxu0 0
    %200 = vmatprep.subr.bf16.mxu0 0
    %201 = vmatpush2.bf16.msra.mxu0 0
    %202 = vmatprep.subr.bf16.mxu0 0
    %203 = vmatpush2.bf16.msra.mxu0 0
    %204 = vmatprep.subr.bf16.mxu0 0
    %205 = vmatpush2.bf16.msra.mxu0 0
    %206 = vmatprep.subr.bf16.mxu0 0
    %207 = vmatpush2.bf16.msra.mxu0 0
    %208 = vmatprep.subr.bf16.mxu0 0
    %209 = vmatpush2.bf16.msra.mxu0 0
    %210 = vmatprep.subr.bf16.mxu0 0
    %211 = vmatpush2.bf16.msra.mxu0 0
    %212 = vmatprep.mubr.bf16.mxu0 0
    %213 = vmatmul.mubr.bf16.gmra.mxu0 %v178
    %v214 = vpop.f32.mrf.mxu0
    %v215 = vadd.f32 0.0, %v214
    %v216 = vpop.f32.mrf.mxu0
    %v217 = vpop.f32.mrf.mxu0
    %v218 = vpop.f32.mrf.mxu0
    %219 = vdwg.mxu0
    %v224 = vunpack.c.l.b16 %v154
    %v225 = vunpack.c.l.b16 %v155
    %v226 = vunpack.c.l.b16 %v156
    %v227 = vunpack.c.l.b16 %v157
    %v228 = vpack.c.b16 %v225, %v224
    %v229 = vpack.c.b16 %v227, %v226
    %v233 = vsel %vm176, %v153, 0
    %235 = vmatprep.subr.bf16.mxu0 0
    %236 = vmatpush1.bf16.msra.mxu0 0
    %237 = vmatprep.subr.bf16.mxu0 0
    %238 = vmatpush1.bf16.msra.mxu0 0
    %239 = vmatprep.subr.bf16.mxu0 0
    %240 = vmatpush1.bf16.msra.mxu0 0
    %241 = vmatprep.subr.bf16.mxu0 0
    %242 = vmatpush1.bf16.msra.mxu0 0
    %243 = vmatprep.subr.bf16.mxu0 0
    %244 = vmatpush1.bf16.msra.mxu0 0
    %245 = vmatprep.subr.bf16.mxu0 0
    %246 = vmatpush1.bf16.msra.mxu0 0
    %247 = vmatprep.subr.bf16.mxu0 0
    %248 = vmatpush1.bf16.msra.mxu0 %v229
    %249 = vmatprep.subr.bf16.mxu0 0
    %250 = vmatpush1.bf16.msra.mxu0 %v228
    %251 = vmatprep.subr.bf16.mxu0 0
    %252 = vmatpush2.bf16.msra.mxu0 0
    %253 = vmatprep.subr.bf16.mxu0 0
    %254 = vmatpush2.bf16.msra.mxu0 0
    %255 = vmatprep.subr.bf16.mxu0 0
    %256 = vmatpush2.bf16.msra.mxu0 0
    %257 = vmatprep.subr.bf16.mxu0 0
    %258 = vmatpush2.bf16.msra.mxu0 0
    %259 = vmatprep.subr.bf16.mxu0 0
    %260 = vmatpush2.bf16.msra.mxu0 0
    %261 = vmatprep.subr.bf16.mxu0 0
    %262 = vmatpush2.bf16.msra.mxu0 0
    %263 = vmatprep.subr.bf16.mxu0 0
    %264 = vmatpush2.bf16.msra.mxu0 0
    %265 = vmatprep.subr.bf16.mxu0 0
    %266 = vmatpush2.bf16.msra.mxu0 0
    %267 = vmatprep.mubr.bf16.mxu0 0
    %268 = vmatmul.mubr.bf16.gmra.mxu0 %v233
    %v269 = vpop.f32.mrf.mxu0
    %v270 = vadd.f32 %v215, %v269
    %v271 = vpop.f32.mrf.mxu0
    %v272 = vpop.f32.mrf.mxu0
    %v273 = vpop.f32.mrf.mxu0
    %274 = vdwg.mxu0
    %v275 = vld [vmem:[%s4] sm:$0x1]
    %v277 = vlaneseq
    %v278 = vshrl.u32 %v277, 7
    %v279 = vsub.s32 0, %v278
    %v280 = vrot.slane %v275, %v279
    %v282 = vadd.f32 %v270, %v280
    %vm283 = vcmask 58368
    %284 = vst.msk [vmem:[#allocation5] sm:$0x3] %vm283, %v282
    %v285 = vmax.f32 %v282, 0.0
    %vm286 = vcmp.ne.f32.partialorder %v282, %v282
    %v287 = vadd.f32 %v282, 0.0
    %v288 = vand.u32 2147483647, %v282
    %v289 = vsub.f32 0.0, %v288
    %v290 = vmul.f32 %v289, 1.442695
    %v291 = vpow.pop %v290
    %v292 = vadd.f32 %v291, 1.0
    %v293 = vlog2.pop %v292
    %v294 = vmul.f32 %v293, 0.6931472
    %v295 = vmul.f32 -0.5, %v291
    %v296 = vadd.f32 %v295, 1.0
    %v297 = vmul.f32 %v296, %v291
    %v298 = vand.u32 2147483647, %v291
    %vm299 = vcmp.lt.f32.partialorder %v298, 0.0004427343
    %v300 = vsel %vm299, %v297, %v294
    %v301 = vadd.f32 %v285, %v300
    %v302 = vsel %vm286, %v287, %v301
    %v303 = vadd.f32 %v302, 0.001
    %305 = vrot.lane.b32.xlu0 %v303, 120
    %v306 = vpop.permute.xlu0 %305
    %308 = vst.msk [vmem:[#allocation7] sm:$0x3] %vm283, %v306
    // Predicated region
    $region59: #{plan_recognition_forward.5} parent=1 // pred_check
      _
    $region60: #{plan_recognition_forward.5} parent=1 // pred_check_branch
      %310 = sbr.rel (0) target = $region62
    $region61: #{plan_recognition_forward.5} parent=1 // pred_region
      %s312 = ssub.s32 32, 32
      %313 = vsyncadd [#allocation6], %s312
      %s315 = sshll.u32 [#allocation5], 4
      %s316 = int_to_ptr.vmem [resolvable:$true] %s315
      %318 = dma.vmem_to_hbm [thread:$0]  %s316, 32, %s5, [#allocation6]
    $region62: #{plan_recognition_forward.5} parent=1 // pred_fallthru
      _
    // Predicated region
    $region63: #{plan_recognition_forward.5} parent=1 // pred_check
      _
    $region64: #{plan_recognition_forward.5} parent=1 // pred_check_branch
      %320 = sbr.rel (0) target = $region66
    $region65: #{plan_recognition_forward.5} parent=1 // pred_region
      %s322 = ssub.s32 32, 32
      %323 = vsyncadd [#allocation8], %s322
      %s325 = sshll.u32 [#allocation7], 4
      %s326 = int_to_ptr.vmem [resolvable:$true] %s325
      %328 = dma.vmem_to_hbm [thread:$0]  %s326, 32, %s6, [#allocation8]
    $region66: #{plan_recognition_forward.5} parent=1 // pred_fallthru
      _
    // Predicated region
    $region67: #{plan_recognition_forward.5} parent=1 // pred_check
      _
    $region68: #{plan_recognition_forward.5} parent=1 // pred_check_branch
      %330 = sbr.rel (0) target = $region70
    $region69: #{plan_recognition_forward.5} parent=1 // pred_region
      %331 = dma.done [#allocation6], 32
    $region70: #{plan_recognition_forward.5} parent=1 // pred_fallthru
      _
    // Predicated region
    $region71: #{plan_recognition_forward.5} parent=1 // pred_check
      _
    $region72: #{plan_recognition_forward.5} parent=1 // pred_check_branch
      %333 = sbr.rel (0) target = $region74
    $region73: #{plan_recognition_forward.5} parent=1 // pred_region
      %334 = dma.done [#allocation8], 32
    $region74: #{plan_recognition_forward.5} parent=1 // pred_fallthru
      _
    %335 = vsyncpa [#allocation6], 1
    %336 = vsyncpa [#allocation8], 1
  %337 = vsyncmov [#allocation4]
  %s338 = vpop.sfrf %337
  %p339 = scmp.eq.s32.totalorder %s338, 0
  %p340 = pneg %p339
  %342 = shalt.err (%p340)

</llo_original>
